<compile_context>
chip_gen: v7x
topology: tpu7x:2x2x1
jax: 0.10.0
libtpu: 0.0.40
codegen_flags: <defaults>
</compile_context>

<pallas_src>
import functools

import jax
import jax.numpy as jnp
from jax.experimental import pallas as pl
from jax.experimental.pallas import tpu as pltpu


def _attention_kernel(x_ref, wqkv_ref, pos_ref, wo_ref, bo_ref, o_ref, *,
                      heads, dim_head, scale):
    inner = heads * dim_head

    # Fused QKV projection: one full-width (3*H*D lanes) bf16 MXU matmul,
    # f32 accumulation.
    x = x_ref[0].astype(jnp.bfloat16)                                     # (N, dim)
    qkv = jnp.dot(x, wqkv_ref[...], preferred_element_type=jnp.float32)   # (N, 3*HD)

    q = qkv[:, :inner] * scale           # scale folded into q == scaling the dots
    k = qkv[:, inner:2 * inner]
    v = qkv[:, 2 * inner:]

    # Heads folded into the body (no head grid axis); small static unrolled loop.
    ctx_parts = []
    for h in range(heads):
        lo, hi = h * dim_head, (h + 1) * dim_head
        qh = q[:, lo:hi].astype(jnp.bfloat16)                             # (N, D)
        kh = k[:, lo:hi].astype(jnp.bfloat16)                             # (N, D)
        vh = v[:, lo:hi].astype(jnp.bfloat16)                             # (N, D)

        # dots = q k^T * scale + pos_embedding[h]   (contract on D, no transpose)
        dots = jax.lax.dot_general(qh, kh, (((1,), (1,)), ((), ())),
                                   preferred_element_type=jnp.float32)    # (N, N)
        dots = dots + pos_ref[0, h]

        # Numerically-stable softmax over keys; elementwise math in f32,
        # divide -> EUP approx reciprocal.
        m = jnp.max(dots, axis=-1, keepdims=True)
        e = jnp.exp(dots - m)
        attn = e * pl.reciprocal(jnp.sum(e, axis=-1, keepdims=True), approx=True)

        ctx_parts.append(
            jnp.dot(attn.astype(jnp.bfloat16), vh,
                    preferred_element_type=jnp.float32).astype(jnp.bfloat16))

    # Concatenate heads and run the output projection once with a full
    # inner-dim (H*D >= 128) contraction.
    ctx = jnp.concatenate(ctx_parts, axis=-1)                             # (N, H*D)
    out = jnp.dot(ctx, wo_ref[...], preferred_element_type=jnp.float32)   # (N, dim)
    o_ref[0] = (out + bo_ref[...]).astype(o_ref.dtype)


def attention(x, w_qkv, pos_emb, w_out, b_out, *, heads, dim_head):
    """x: (B, N, dim) f32.  w_qkv: (dim, 3*H*D) (pre-transposed, head-major).
    pos_emb: (1, H, N, N) f32.  w_out: (H*D, dim) (pre-transposed).  b_out: (1, dim).
    Returns (B, N, dim) f32.  Assumes project_out=True."""
    B, N, dim = x.shape
    inner = heads * dim_head
    assert w_qkv.shape == (dim, 3 * inner)
    assert pos_emb.shape == (1, heads, N, N)
    assert w_out.shape == (inner, dim)
    assert b_out.shape == (1, dim)
    # The whole (N, N) score block per head is materialized in VMEM.
    # TODO(synk): for num_patches >> 128 (or H*N*N f32 > ~24 MiB on v7x) add a
    # flash-style query/key grid axis and stream pos_emb in bf16 instead of
    # keeping it fully resident.
    assert N % 128 == 0 and dim % 128 == 0 and inner % 128 == 0

    scale = float(dim_head) ** -0.5

    # bf16 matmul operands (f32 accumulation happens inside the kernel).
    # TODO(synk): pre-pack / cast weights once at model load instead of per call.
    w_qkv_bf = w_qkv.astype(jnp.bfloat16)
    w_out_bf = w_out.astype(jnp.bfloat16)

    kernel = functools.partial(_attention_kernel, heads=heads,
                               dim_head=dim_head, scale=scale)
    return pl.pallas_call(
        kernel,
        out_shape=jax.ShapeDtypeStruct((B, N, dim), jnp.float32),
        grid_spec=pltpu.PrefetchScalarGridSpec(
            num_scalar_prefetch=0,
            grid=(B,),                                      # batch only; heads in-body
            in_specs=[
                pl.BlockSpec((1, N, dim), lambda b: (b, 0, 0)),           # x
                pl.BlockSpec((dim, 3 * inner), lambda b: (0, 0)),         # w_qkv (resident)
                pl.BlockSpec((1, heads, N, N), lambda b: (0, 0, 0, 0)),   # pos   (resident)
                pl.BlockSpec((inner, dim), lambda b: (0, 0)),             # w_out (resident)
                pl.BlockSpec((1, dim), lambda b: (0, 0)),                 # b_out (resident)
            ],
            out_specs=pl.BlockSpec((1, N, dim), lambda b: (b, 0, 0)),
        ),
        compiler_params=pltpu.CompilerParams(
            dimension_semantics=("parallel",)),
        # TODO(synk): if B == 1 at inference, add a query-row-tile "parallel"
        # grid axis so both v7x TensorCores get work.
    )(x, w_qkv_bf, pos_emb, w_out_bf, b_out)


def _reference(x, w_qkv, pos_emb, w_out, b_out, *, heads, dim_head):
    B, N, dim = x.shape
    inner = heads * dim_head
    scale = float(dim_head) ** -0.5
    qkv = x @ w_qkv                                                 # (B, N, 3*inner)
    q, k, v = jnp.split(qkv, 3, axis=-1)
    to_heads = lambda t: t.reshape(B, N, heads, dim_head).transpose(0, 2, 1, 3)
    q, k, v = map(to_heads, (q, k, v))                              # (B, H, N, D)
    dots = jnp.einsum("bhnd,bhmd->bhnm", q, k) * scale + pos_emb
    attn = jax.nn.softmax(dots, axis=-1)
    out = jnp.einsum("bhnm,bhmd->bhnd", attn, v)
    out = out.transpose(0, 2, 1, 3).reshape(B, N, inner)
    return out @ w_out + b_out                                      # Dropout(0) = id


if __name__ == "__main__":
    # Small shapes consistent with the module defaults (num_patches, dim_head),
    # scaled down: B=2, heads=2, dim_head=64 -> inner_dim=128, dim=128, N=128.
    B, HEADS, DIM_HEAD, N = 2, 2, 64, 128
    DIM = 128
    INNER = HEADS * DIM_HEAD

    key = jax.random.PRNGKey(0)
    kx, kqkv, kpos, kwo, kbo = jax.random.split(key, 5)

    x = jax.random.normal(kx, (B, N, DIM), dtype=jnp.float32)

    # PyTorch-style uniform Linear init, generated directly in pre-transposed layout.
    lim_qkv = 1.0 / jnp.sqrt(DIM)
    w_qkv = jax.random.uniform(kqkv, (DIM, 3 * INNER),
                               minval=-lim_qkv, maxval=lim_qkv, dtype=jnp.float32)
    pos_emb = jax.random.normal(kpos, (1, HEADS, N, N), dtype=jnp.float32)
    lim_o = 1.0 / jnp.sqrt(INNER)
    w_out = jax.random.uniform(kwo, (INNER, DIM),
                               minval=-lim_o, maxval=lim_o, dtype=jnp.float32)
    b_out = jax.random.uniform(kbo, (1, DIM),
                               minval=-lim_o, maxval=lim_o, dtype=jnp.float32)

    out = attention(x, w_qkv, pos_emb, w_out, b_out, heads=HEADS, dim_head=DIM_HEAD)
    out = jax.block_until_ready(out)

    ref = _reference(x, w_qkv, pos_emb, w_out, b_out, heads=HEADS, dim_head=DIM_HEAD)
    assert out.shape == (B, N, DIM)
    # bf16 matmul operands + approx reciprocal -> relaxed tolerance vs f32 reference.
    assert jnp.allclose(out, ref, atol=2e-2, rtol=2e-2), "mismatch vs reference"
    print("KERNEL_OK")
</pallas_src>

<mosaic_0001>
module attributes {stable_mosaic.version = 11 : i64} {
  func.func @_attention_kernel(%arg0: i32, %arg1: memref<1x128x128xf32, #tpu.memory_space<vmem>>, %arg2: memref<128x384xbf16, #tpu.memory_space<vmem>>, %arg3: memref<1x2x128x128xf32, #tpu.memory_space<vmem>>, %arg4: memref<128x128xbf16, #tpu.memory_space<vmem>>, %arg5: memref<1x128xf32, #tpu.memory_space<vmem>>, %arg6: memref<1x128x128xf32, #tpu.memory_space<vmem>>) attributes {dimension_semantics = [#tpu.dimension_semantics<parallel>], iteration_bounds = array<i64: 2>, scalar_prefetch = 0 : i64, scratch_operands = 0 : i64, tpu.core_type = #tpu.core_type<tc>, window_params = [{transform_indices = @transform_0, window_bounds = array<i64: 1, 128, 128>}, {pipeline_mode = #tpu.pipeline_mode<synchronous>, transform_indices = @transform_1, window_bounds = array<i64: 128, 384>}, {pipeline_mode = #tpu.pipeline_mode<synchronous>, transform_indices = @transform_2, window_bounds = array<i64: 1, 2, 128, 128>}, {pipeline_mode = #tpu.pipeline_mode<synchronous>, transform_indices = @transform_3, window_bounds = array<i64: 128, 128>}, {pipeline_mode = #tpu.pipeline_mode<synchronous>, transform_indices = @transform_4, window_bounds = array<i64: 1, 128>}, {transform_indices = @transform_5, window_bounds = array<i64: 1, 128, 128>}]} {
    %c0 = arith.constant 0 : index
    %c0_0 = arith.constant 0 : index
    %c0_1 = arith.constant 0 : index
    %0 = vector.load %arg1[%c0, %c0_0, %c0_1] : memref<1x128x128xf32, #tpu.memory_space<vmem>>, vector<1x128x128xf32>
    %1 = vector.shape_cast %0 : vector<1x128x128xf32> to vector<128x128xf32>
    %2 = arith.truncf %1 : vector<128x128xf32> to vector<128x128xbf16>
    %c0_2 = arith.constant 0 : index
    %c0_3 = arith.constant 0 : index
    %3 = vector.load %arg2[%c0_2, %c0_3] : memref<128x384xbf16, #tpu.memory_space<vmem>>, vector<128x384xbf16>
    %cst = arith.constant dense<0.000000e+00> : vector<128x384xf32>
    %4 = tpu.matmul %2, %3, %cst {dimension_numbers = #tpu.dot_dimension_numbers<[1], [0], [0], [1], [0, 0, 1, 1], [], []>} : vector<128x128xbf16>, vector<128x384xbf16>, vector<128x384xf32> -> vector<128x384xf32>
    %5 = vector.extract_strided_slice %4 {offsets = [0, 0], sizes = [128, 128], strides = [1, 1]} : vector<128x384xf32> to vector<128x128xf32>
    %cst_4 = arith.constant 1.250000e-01 : f32
    %6 = vector.broadcast %cst_4 : f32 to vector<128x128xf32>
    %7 = arith.mulf %5, %6 : vector<128x128xf32>
    %8 = vector.extract_strided_slice %4 {offsets = [0, 128], sizes = [128, 128], strides = [1, 1]} : vector<128x384xf32> to vector<128x128xf32>
    %9 = vector.extract_strided_slice %4 {offsets = [0, 256], sizes = [128, 128], strides = [1, 1]} : vector<128x384xf32> to vector<128x128xf32>
    %10 = vector.extract_strided_slice %7 {offsets = [0, 0], sizes = [128, 64], strides = [1, 1]} : vector<128x128xf32> to vector<128x64xf32>
    %11 = arith.truncf %10 : vector<128x64xf32> to vector<128x64xbf16>
    %12 = vector.extract_strided_slice %8 {offsets = [0, 0], sizes = [128, 64], strides = [1, 1]} : vector<128x128xf32> to vector<128x64xf32>
    %13 = arith.truncf %12 : vector<128x64xf32> to vector<128x64xbf16>
    %14 = vector.extract_strided_slice %9 {offsets = [0, 0], sizes = [128, 64], strides = [1, 1]} : vector<128x128xf32> to vector<128x64xf32>
    %15 = arith.truncf %14 : vector<128x64xf32> to vector<128x64xbf16>
    %cst_5 = arith.constant dense<0.000000e+00> : vector<128x128xf32>
    %16 = tpu.matmul %11, %13, %cst_5 {dimension_numbers = #tpu.dot_dimension_numbers<[1], [1], [0], [0], [0, 0, 1, 0], [], []>} : vector<128x64xbf16>, vector<128x64xbf16>, vector<128x128xf32> -> vector<128x128xf32>
    %c0_6 = arith.constant 0 : index
    %c0_7 = arith.constant 0 : index
    %c0_8 = arith.constant 0 : index
    %c0_9 = arith.constant 0 : index
    %17 = vector.load %arg3[%c0_6, %c0_7, %c0_8, %c0_9] : memref<1x2x128x128xf32, #tpu.memory_space<vmem>>, vector<1x1x128x128xf32>
    %18 = vector.shape_cast %17 : vector<1x1x128x128xf32> to vector<128x128xf32>
    %19 = arith.addf %16, %18 : vector<128x128xf32>
    %cst_10 = arith.constant dense<0xFF800000> : vector<128xf32>
    %20 = vector.multi_reduction <maximumf>, %19, %cst_10 [1] : vector<128x128xf32> to vector<128xf32>
    %21 = vector.shape_cast %20 : vector<128xf32> to vector<128x1xf32>
    %22 = vector.broadcast %21 : vector<128x1xf32> to vector<128x128xf32>
    %23 = arith.subf %19, %22 : vector<128x128xf32>
    %24 = math.exp %23 : vector<128x128xf32>
    %cst_11 = arith.constant dense<0.000000e+00> : vector<128xf32>
    %25 = vector.multi_reduction <add>, %24, %cst_11 [1] : vector<128x128xf32> to vector<128xf32>
    %26 = vector.shape_cast %25 : vector<128xf32> to vector<128x1xf32>
    %27 = tpu.reciprocal %26 {approx = true} : vector<128x1xf32> -> vector<128x1xf32>
    %28 = vector.broadcast %27 : vector<128x1xf32> to vector<128x128xf32>
    %29 = arith.mulf %24, %28 : vector<128x128xf32>
    %30 = arith.truncf %29 : vector<128x128xf32> to vector<128x128xbf16>
    %cst_12 = arith.constant dense<0.000000e+00> : vector<128x64xf32>
    %31 = tpu.matmul %30, %15, %cst_12 {dimension_numbers = #tpu.dot_dimension_numbers<[1], [0], [0], [1], [0, 0, 1, 1], [], []>} : vector<128x128xbf16>, vector<128x64xbf16>, vector<128x64xf32> -> vector<128x64xf32>
    %32 = arith.truncf %31 : vector<128x64xf32> to vector<128x64xbf16>
    %33 = vector.extract_strided_slice %7 {offsets = [0, 64], sizes = [128, 64], strides = [1, 1]} : vector<128x128xf32> to vector<128x64xf32>
    %34 = arith.truncf %33 : vector<128x64xf32> to vector<128x64xbf16>
    %35 = vector.extract_strided_slice %8 {offsets = [0, 64], sizes = [128, 64], strides = [1, 1]} : vector<128x128xf32> to vector<128x64xf32>
    %36 = arith.truncf %35 : vector<128x64xf32> to vector<128x64xbf16>
    %37 = vector.extract_strided_slice %9 {offsets = [0, 64], sizes = [128, 64], strides = [1, 1]} : vector<128x128xf32> to vector<128x64xf32>
    %38 = arith.truncf %37 : vector<128x64xf32> to vector<128x64xbf16>
    %cst_13 = arith.constant dense<0.000000e+00> : vector<128x128xf32>
    %39 = tpu.matmul %34, %36, %cst_13 {dimension_numbers = #tpu.dot_dimension_numbers<[1], [1], [0], [0], [0, 0, 1, 0], [], []>} : vector<128x64xbf16>, vector<128x64xbf16>, vector<128x128xf32> -> vector<128x128xf32>
    %c0_14 = arith.constant 0 : index
    %c1 = arith.constant 1 : index
    %c0_15 = arith.constant 0 : index
    %c0_16 = arith.constant 0 : index
    %40 = vector.load %arg3[%c0_14, %c1, %c0_15, %c0_16] : memref<1x2x128x128xf32, #tpu.memory_space<vmem>>, vector<1x1x128x128xf32>
    %41 = vector.shape_cast %40 : vector<1x1x128x128xf32> to vector<128x128xf32>
    %42 = arith.addf %39, %41 : vector<128x128xf32>
    %cst_17 = arith.constant dense<0xFF800000> : vector<128xf32>
    %43 = vector.multi_reduction <maximumf>, %42, %cst_17 [1] : vector<128x128xf32> to vector<128xf32>
    %44 = vector.shape_cast %43 : vector<128xf32> to vector<128x1xf32>
    %45 = vector.broadcast %44 : vector<128x1xf32> to vector<128x128xf32>
    %46 = arith.subf %42, %45 : vector<128x128xf32>
    %47 = math.exp %46 : vector<128x128xf32>
    %cst_18 = arith.constant dense<0.000000e+00> : vector<128xf32>
    %48 = vector.multi_reduction <add>, %47, %cst_18 [1] : vector<128x128xf32> to vector<128xf32>
    %49 = vector.shape_cast %48 : vector<128xf32> to vector<128x1xf32>
    %50 = tpu.reciprocal %49 {approx = true} : vector<128x1xf32> -> vector<128x1xf32>
    %51 = vector.broadcast %50 : vector<128x1xf32> to vector<128x128xf32>
    %52 = arith.mulf %47, %51 : vector<128x128xf32>
    %53 = arith.truncf %52 : vector<128x128xf32> to vector<128x128xbf16>
    %cst_19 = arith.constant dense<0.000000e+00> : vector<128x64xf32>
    %54 = tpu.matmul %53, %38, %cst_19 {dimension_numbers = #tpu.dot_dimension_numbers<[1], [0], [0], [1], [0, 0, 1, 1], [], []>} : vector<128x128xbf16>, vector<128x64xbf16>, vector<128x64xf32> -> vector<128x64xf32>
    %55 = arith.truncf %54 : vector<128x64xf32> to vector<128x64xbf16>
    %56 = tpu.concatenate %32, %55 in 1 : vector<128x64xbf16>, vector<128x64xbf16> -> vector<128x128xbf16>
    %c0_20 = arith.constant 0 : index
    %c0_21 = arith.constant 0 : index
    %57 = vector.load %arg4[%c0_20, %c0_21] : memref<128x128xbf16, #tpu.memory_space<vmem>>, vector<128x128xbf16>
    %cst_22 = arith.constant dense<0.000000e+00> : vector<128x128xf32>
    %58 = tpu.matmul %56, %57, %cst_22 {dimension_numbers = #tpu.dot_dimension_numbers<[1], [0], [0], [1], [0, 0, 1, 1], [], []>} : vector<128x128xbf16>, vector<128x128xbf16>, vector<128x128xf32> -> vector<128x128xf32>
    %c0_23 = arith.constant 0 : index
    %c0_24 = arith.constant 0 : index
    %59 = vector.load %arg5[%c0_23, %c0_24] : memref<1x128xf32, #tpu.memory_space<vmem>>, vector<1x128xf32>
    %60 = vector.broadcast %59 : vector<1x128xf32> to vector<128x128xf32>
    %61 = arith.addf %58, %60 : vector<128x128xf32>
    %c0_25 = arith.constant 0 : index
    %c0_26 = arith.constant 0 : index
    %c0_27 = arith.constant 0 : index
    %62 = vector.load %arg6[%c0_25, %c0_26, %c0_27] : memref<1x128x128xf32, #tpu.memory_space<vmem>>, vector<1x128x128xf32>
    %63 = vector.shape_cast %62 : vector<1x128x128xf32> to vector<128x128xf32>
    %64 = vector.shape_cast %61 : vector<128x128xf32> to vector<1x128x128xf32>
    tpu.vector_store %arg6[%c0_25, %c0_26, %c0_27], %64 {strides = array<i32>} : memref<1x128x128xf32, #tpu.memory_space<vmem>>, vector<1x128x128xf32>,
    return
  }
  func.func @transform_0(%arg0: i32) -> (i32, i32, i32) {
    %c0_i32 = arith.constant 0 : i32
    %c0_i32_0 = arith.constant 0 : i32
    %c0_i32_1 = arith.constant 0 : i32
    return %arg0, %c0_i32, %c0_i32_0 : i32, i32, i32
  }
  func.func @transform_1(%arg0: i32) -> (i32, i32) {
    %c0_i32 = arith.constant 0 : i32
    %c0_i32_0 = arith.constant 0 : i32
    %c0_i32_1 = arith.constant 0 : i32
    return %c0_i32, %c0_i32_0 : i32, i32
  }
  func.func @transform_2(%arg0: i32) -> (i32, i32, i32, i32) {
    %c0_i32 = arith.constant 0 : i32
    %c0_i32_0 = arith.constant 0 : i32
    %c0_i32_1 = arith.constant 0 : i32
    %c0_i32_2 = arith.constant 0 : i32
    %c0_i32_3 = arith.constant 0 : i32
    return %c0_i32, %c0_i32_0, %c0_i32_1, %c0_i32_2 : i32, i32, i32, i32
  }
  func.func @transform_3(%arg0: i32) -> (i32, i32) {
    %c0_i32 = arith.constant 0 : i32
    %c0_i32_0 = arith.constant 0 : i32
    %c0_i32_1 = arith.constant 0 : i32
    return %c0_i32, %c0_i32_0 : i32, i32
  }
  func.func @transform_4(%arg0: i32) -> (i32, i32) {
    %c0_i32 = arith.constant 0 : i32
    %c0_i32_0 = arith.constant 0 : i32
    %c0_i32_1 = arith.constant 0 : i32
    return %c0_i32, %c0_i32_0 : i32, i32
  }
  func.func @transform_5(%arg0: i32) -> (i32, i32, i32) {
    %c0_i32 = arith.constant 0 : i32
    %c0_i32_0 = arith.constant 0 : i32
    %c0_i32_1 = arith.constant 0 : i32
    return %arg0, %c0_i32, %c0_i32_0 : i32, i32, i32
  }
}

</mosaic_0001>

<llo_original>
// kernel: tpu_custom_call.1
$region0: #{tpu_custom_call.1}
  #allocation0 [shape = 'u32[]', space=smem, size = 0x4, offset = 0x4, fixed_abs, tag = 'smem constant byte address 0x4 - core index']
  #allocation1 [shape = 'u32[144,128]{1,0:T(1,128)}', space=vmem, size = 0x12000, scoped, tag = 'internal scratch']
  %s0 = inlined_call_operand.hbm [shape: f32[2,128,128], index: 0, kind: input, shape index: {}]
  %s1 = inlined_call_operand.hbm [shape: bf16[128,384], index: 1, kind: input, shape index: {}]
  %s2 = inlined_call_operand.hbm [shape: f32[1,2,128,128], index: 2, kind: input, shape index: {}]
  %s3 = inlined_call_operand.hbm [shape: bf16[128,128], index: 3, kind: input, shape index: {}]
  %s4 = inlined_call_operand.vmem [shape: f32[1,128], index: 4, kind: input, shape index: {}]
  %s5 = inlined_call_operand.hbm [shape: f32[2,128,128], index: 5, kind: output, shape index: {}]
  %s6 = sld [smem:[#allocation0]]
  $region69: #{tpu_custom_call.1} parent=0
    _
  %s8 = ssub.s32 1, %s6
  %s9 = scalar_select 0, %s8, %s6
  $region1: #{tpu_custom_call.1} parent=0
    #allocation2 [shape = 'u8[131072]{0}', space=vmem, size = 0x20000, scoped, tag = 'input window, operand 0']
    #allocation3 [shape = 's32[2]{0}', space=sflag, size = 0x8, scoped, tag = 'scoped memory for tpu_custom_call.1']
    #allocation4 [shape = 's32[2]{0}', space=sflag, size = 0x8, scoped, tag = 'scoped memory for tpu_custom_call.1']
    #allocation5 [shape = 'u8[98304]{0}', space=vmem, size = 0x18000, scoped, tag = 'input window, operand 1, single buffered']
    #allocation6 [shape = 's32[1]{0}', space=sflag, size = 0x4, scoped, tag = 'scoped memory for tpu_custom_call.1']
    #allocation7 [shape = 'u8[131072]{0}', space=vmem, size = 0x20000, scoped, tag = 'input window, operand 2, single buffered']
    #allocation8 [shape = 'u8[32768]{0}', space=vmem, size = 0x8000, scoped, tag = 'input window, operand 3, single buffered']
    #allocation9 [shape = 's32[1]{0}', space=sflag, size = 0x4, scoped, tag = 'scoped memory for tpu_custom_call.1']
    #allocation10 [shape = 'u8[131072]{0}', space=vmem, size = 0x20000, scoped, tag = 'output window, operand 0']
    %10 = vsyncpa [#allocation3], 0
    %s11 = scalar_lea.sflag [#allocation3], 1
    %12 = vsyncpa %s11, 0
    %13 = vsyncpa [#allocation6], 0
    %14 = vsyncpa [#allocation9], 0
    %15 = vsyncpa [#allocation4], 0
    %s16 = scalar_lea.sflag [#allocation4], 1
    %17 = vsyncpa %s16, 0
    loop: start=0, step=1, limit=4
    $region2: #{tpu_custom_call.1} parent=1 // loop_pre_header
      _
    $region3: #{tpu_custom_call.1} parent=1 // loop_header
      %s19 = sphi 0, %s23
      %p20 = scmp.ge.s32.totalorder %s19, 4
      %s29 = sphi 0, %s31
      %s32 = sphi 0, %s29
      %s33 = sphi 0, %s32
      %s49 = sphi 0, %s33
      %s53 = sphi 0, %s53
      %s55 = sphi 0, %s53
      %s56 = sphi 0, %s55
      %s70 = sphi 0, %s56
      %s74 = sphi 0, %s74
      %s76 = sphi 0, %s74
      %s77 = sphi 0, %s76
      %s91 = sphi 0, %s77
      %s95 = sphi 0, %s95
      %s97 = sphi 0, %s95
      %s98 = sphi 0, %s97
      %s112 = sphi 0, %s98
      %s116 = sphi 0, %s116
      %s118 = sphi 0, %s116
      %s119 = sphi 0, %s118
      %s133 = sphi 0, %s119
      %s139 = sphi 0, %s141
      %s142 = sphi 0, %s139
      %s143 = sphi 0, %s142
      %s159 = sphi 0, %s143
    $region4: #{tpu_custom_call.1} parent=1 // loop_header_branch
      %22 = sbr.rel (%p20) target = $region8
    $region5: #{tpu_custom_call.1} parent=1 // loop_body
      %s24 = ssub.s32 %s19, 1
      %s25 = ssub.s32 %s19, 2
      %s26 = sadd.s32 %s19, 1
      %s27 = ssub.s32 %s19, %s26
      %p28 = scmp.eq.s32.totalorder %s27, 0
      %s30 = sadd.s32 %s29, 1
      %s31 = scalar_select %p28, %s29, %s30
      %p34 = pneg %p28
      %p35 = scmp.eq.s32.totalorder %s19, 1
      %p36 = por %p34, %p35
      %p37 = scmp.ne.s32.totalorder %s29, %s32
      %p38 = scmp.eq.s32.totalorder %s19, 0
      %p39 = por %p37, %p38
      %p40 = scmp.ne.s32.totalorder %s29, %s32
      %p41 = scmp.eq.s32.totalorder %s24, 1
      %p42 = por %p40, %p41
      %p43 = scmp.ne.s32.totalorder %s32, %s33
      %p44 = scmp.eq.s32.totalorder %s24, 0
      %p45 = por %p43, %p44
      %p46 = scmp.ne.s32.totalorder %s32, %s33
      %p47 = scmp.eq.s32.totalorder %s25, 1
      %p48 = por %p46, %p47
      %p50 = scmp.ne.s32.totalorder %s33, %s49
      %p51 = scmp.eq.s32.totalorder %s25, 0
      %p52 = por %p50, %p51
      %s54 = sadd.s32 %s53, 1
      %p57 = scmp.eq.s32.totalorder %s19, 1
      %p58 = scmp.ne.s32.totalorder %s53, %s55
      %p59 = scmp.eq.s32.totalorder %s19, 0
      %p60 = por %p58, %p59
      %p61 = scmp.ne.s32.totalorder %s53, %s55
      %p62 = scmp.eq.s32.totalorder %s24, 1
      %p63 = por %p61, %p62
      %p64 = scmp.ne.s32.totalorder %s55, %s56
      %p65 = scmp.eq.s32.totalorder %s24, 0
      %p66 = por %p64, %p65
      %p67 = scmp.ne.s32.totalorder %s55, %s56
      %p68 = scmp.eq.s32.totalorder %s25, 1
      %p69 = por %p67, %p68
      %p71 = scmp.ne.s32.totalorder %s56, %s70
      %p72 = scmp.eq.s32.totalorder %s25, 0
      %p73 = por %p71, %p72
      %s75 = sadd.s32 %s74, 1
      %p78 = scmp.eq.s32.totalorder %s19, 1
      %p79 = scmp.ne.s32.totalorder %s74, %s76
      %p80 = scmp.eq.s32.totalorder %s19, 0
      %p81 = por %p79, %p80
      %p82 = scmp.ne.s32.totalorder %s74, %s76
      %p83 = scmp.eq.s32.totalorder %s24, 1
      %p84 = por %p82, %p83
      %p85 = scmp.ne.s32.totalorder %s76, %s77
      %p86 = scmp.eq.s32.totalorder %s24, 0
      %p87 = por %p85, %p86
      %p88 = scmp.ne.s32.totalorder %s76, %s77
      %p89 = scmp.eq.s32.totalorder %s25, 1
      %p90 = por %p88, %p89
      %p92 = scmp.ne.s32.totalorder %s77, %s91
      %p93 = scmp.eq.s32.totalorder %s25, 0
      %p94 = por %p92, %p93
      %s96 = sadd.s32 %s95, 1
      %p99 = scmp.eq.s32.totalorder %s19, 1
      %p100 = scmp.ne.s32.totalorder %s95, %s97
      %p101 = scmp.eq.s32.totalorder %s19, 0
      %p102 = por %p100, %p101
      %p103 = scmp.ne.s32.totalorder %s95, %s97
      %p104 = scmp.eq.s32.totalorder %s24, 1
      %p105 = por %p103, %p104
      %p106 = scmp.ne.s32.totalorder %s97, %s98
      %p107 = scmp.eq.s32.totalorder %s24, 0
      %p108 = por %p106, %p107
      %p109 = scmp.ne.s32.totalorder %s97, %s98
      %p110 = scmp.eq.s32.totalorder %s25, 1
      %p111 = por %p109, %p110
      %p113 = scmp.ne.s32.totalorder %s98, %s112
      %p114 = scmp.eq.s32.totalorder %s25, 0
      %p115 = por %p113, %p114
      %s117 = sadd.s32 %s116, 1
      %p120 = scmp.eq.s32.totalorder %s19, 1
      %p121 = scmp.ne.s32.totalorder %s116, %s118
      %p122 = scmp.eq.s32.totalorder %s19, 0
      %p123 = por %p121, %p122
      %p124 = scmp.ne.s32.totalorder %s116, %s118
      %p125 = scmp.eq.s32.totalorder %s24, 1
      %p126 = por %p124, %p125
      %p127 = scmp.ne.s32.totalorder %s118, %s119
      %p128 = scmp.eq.s32.totalorder %s24, 0
      %p129 = por %p127, %p128
      %p130 = scmp.ne.s32.totalorder %s118, %s119
      %p131 = scmp.eq.s32.totalorder %s25, 1
      %p132 = por %p130, %p131
      %p134 = scmp.ne.s32.totalorder %s119, %s133
      %p135 = scmp.eq.s32.totalorder %s25, 0
      %p136 = por %p134, %p135
      %s137 = ssub.s32 %s19, %s26
      %p138 = scmp.eq.s32.totalorder %s137, 0
      %s140 = sadd.s32 %s139, 1
      %s141 = scalar_select %p138, %s139, %s140
      %p144 = pneg %p138
      %p145 = scmp.eq.s32.totalorder %s19, 1
      %p146 = por %p144, %p145
      %p147 = scmp.ne.s32.totalorder %s139, %s142
      %p148 = scmp.eq.s32.totalorder %s19, 0
      %p149 = por %p147, %p148
      %p150 = scmp.ne.s32.totalorder %s139, %s142
      %p151 = scmp.eq.s32.totalorder %s24, 1
      %p152 = por %p150, %p151
      %p153 = scmp.ne.s32.totalorder %s142, %s143
      %p154 = scmp.eq.s32.totalorder %s24, 0
      %p155 = por %p153, %p154
      %p156 = scmp.ne.s32.totalorder %s142, %s143
      %p157 = scmp.eq.s32.totalorder %s25, 1
      %p158 = por %p156, %p157
      %p160 = scmp.ne.s32.totalorder %s143, %s159
      %p161 = scmp.eq.s32.totalorder %s25, 0
      %p162 = por %p160, %p161
      %p163 = scmp.le.s32.totalorder 1, %s19
      %p164 = scmp.lt.s32.totalorder %s19, 3
      %p165 = pnand %p163, %p164
      %p166 = pneg %p165
      // Predicated region
      $region9: #{tpu_custom_call.1} parent=5 // pred_check
        _
      $region10: #{tpu_custom_call.1} parent=5 // pred_check_branch
        %168 = sbr.rel (%p165) target = $region12
      $region11: #{tpu_custom_call.1} parent=5 // pred_region
        %s169 = ssub.s32 %s19, 1
        // Predicated region
        $region13: #{tpu_custom_call.1} parent=11 // pred_check
          %p170 = pneg %p66
        $region14: #{tpu_custom_call.1} parent=11 // pred_check_branch
          %172 = sbr.rel (%p170) target = $region16
        $region15: #{tpu_custom_call.1} parent=11 // pred_region
          %s174 = ssub.s32 3072, 3072
          %175 = vsyncadd [#allocation6], %s174
          %s176 = sshll.u32 [#allocation5], 4
          %s177 = int_to_ptr.vmem [resolvable:$true] %s176
          %182 = dma.hbm_to_vmem [thread:$0]  %s1, 3072, %s177, [#allocation6], 192, 192, 12
        $region16: #{tpu_custom_call.1} parent=11 // pred_fallthru
          _
        // Predicated region
        $region17: #{tpu_custom_call.1} parent=11 // pred_check
          %p183 = pneg %p87
        $region18: #{tpu_custom_call.1} parent=11 // pred_check_branch
          %185 = sbr.rel (%p183) target = $region20
        $region19: #{tpu_custom_call.1} parent=11 // pred_region
          %s187 = ssub.s32 4096, 4096
          %188 = vsyncadd [#allocation6], %s187
          %s189 = sshll.u32 [#allocation7], 4
          %s190 = int_to_ptr.vmem [resolvable:$true] %s189
          %195 = dma.hbm_to_vmem [thread:$0]  %s2, 4096, %s190, [#allocation6], 128, 128, 8
        $region20: #{tpu_custom_call.1} parent=11 // pred_fallthru
          _
        // Predicated region
        $region21: #{tpu_custom_call.1} parent=11 // pred_check
          %p196 = pneg %p108
        $region22: #{tpu_custom_call.1} parent=11 // pred_check_branch
          %198 = sbr.rel (%p196) target = $region24
        $region23: #{tpu_custom_call.1} parent=11 // pred_region
          %s200 = ssub.s32 1024, 1024
          %201 = vsyncadd [#allocation9], %s200
          %s202 = sshll.u32 [#allocation8], 4
          %s203 = int_to_ptr.vmem [resolvable:$true] %s202
          %208 = dma.hbm_to_vmem [thread:$0]  %s3, 1024, %s203, [#allocation9], 64, 64, 4
        $region24: #{tpu_custom_call.1} parent=11 // pred_fallthru
          _
        // Predicated region
        $region25: #{tpu_custom_call.1} parent=11 // pred_check
          %p209 = pneg %p129
        $region26: #{tpu_custom_call.1} parent=11 // pred_check_branch
          %211 = sbr.rel (%p209) target = $region28
        $region27: #{tpu_custom_call.1} parent=11 // pred_region
          _
        $region28: #{tpu_custom_call.1} parent=11 // pred_fallthru
          _
      $region12: #{tpu_custom_call.1} parent=5 // pred_fallthru
        _
      %p212 = scmp.lt.s32.totalorder %s19, 2
      // Predicated region
      $region29: #{tpu_custom_call.1} parent=5 // pred_check
        %p213 = pneg %p212
      $region30: #{tpu_custom_call.1} parent=5 // pred_check_branch
        %215 = sbr.rel (%p213) target = $region32
      $region31: #{tpu_custom_call.1} parent=5 // pred_region
        // Predicated region
        $region33: #{tpu_custom_call.1} parent=31 // pred_check
          %p216 = pneg %p39
        $region34: #{tpu_custom_call.1} parent=31 // pred_check_branch
          %218 = sbr.rel (%p216) target = $region36
        $region35: #{tpu_custom_call.1} parent=31 // pred_region
          %s219 = sand.u32 %s29, 1
          %s220 = scalar_lea.sflag [#allocation3], %s219
          %s221 = sand.u32 %s29, 1
          %s222 = smul.addr %s221, 128
          %s223 = scalar_lea.vmem [#allocation2], %s222
          %s225 = ssub.s32 2048, 2048
          %226 = vsyncadd %s220, %s225
          %s227 = smul.addr %s19, 16
          %s228 = smul.addr %s227, 128
          %s229 = scalar_lea.hbm %s0, %s228
          %s230 = sshll.u32 %s223, 4
          %s231 = int_to_ptr.vmem [resolvable:$true] %s230
          %236 = dma.hbm_to_vmem [thread:$0]  %s229, 2048, %s231, %s220, 128, 128, 8
        $region36: #{tpu_custom_call.1} parent=31 // pred_fallthru
          _
      $region32: #{tpu_custom_call.1} parent=5 // pred_fallthru
        _
      %p237 = scmp.le.s32.totalorder 1, %s19
      %p238 = scmp.lt.s32.totalorder %s19, 3
      %p239 = pnand %p237, %p238
      %p240 = pneg %p239
      // Predicated region
      $region37: #{tpu_custom_call.1} parent=5 // pred_check
        _
      $region38: #{tpu_custom_call.1} parent=5 // pred_check_branch
        %242 = sbr.rel (%p239) target = $region40
      $region39: #{tpu_custom_call.1} parent=5 // pred_region
        %s243 = ssub.s32 %s19, 1
        %s244 = sand.u32 %s32, 1
        %s245 = scalar_lea.sflag [#allocation3], %s244
        %s246 = sand.u32 %s32, 1
        %s247 = smul.addr %s246, 128
        %s248 = scalar_lea.vmem [#allocation2], %s247
        // Predicated region
        $region41: #{tpu_custom_call.1} parent=39 // pred_check
          %p249 = pneg %p45
        $region42: #{tpu_custom_call.1} parent=39 // pred_check_branch
          %251 = sbr.rel (%p249) target = $region44
        $region43: #{tpu_custom_call.1} parent=39 // pred_region
          %252 = dma.done %s245, 2048
        $region44: #{tpu_custom_call.1} parent=39 // pred_fallthru
          _
        // Predicated region
        $region45: #{tpu_custom_call.1} parent=39 // pred_check
          %p253 = pneg %p66
        $region46: #{tpu_custom_call.1} parent=39 // pred_check_branch
          %255 = sbr.rel (%p253) target = $region48
        $region47: #{tpu_custom_call.1} parent=39 // pred_region
          %256 = dma.done [#allocation6], 3072
        $region48: #{tpu_custom_call.1} parent=39 // pred_fallthru
          _
        // Predicated region
        $region49: #{tpu_custom_call.1} parent=39 // pred_check
          %p257 = pneg %p87
        $region50: #{tpu_custom_call.1} parent=39 // pred_check_branch
          %259 = sbr.rel (%p257) target = $region52
        $region51: #{tpu_custom_call.1} parent=39 // pred_region
          %260 = dma.done [#allocation6], 4096
        $region52: #{tpu_custom_call.1} parent=39 // pred_fallthru
          _
        // Predicated region
        $region53: #{tpu_custom_call.1} parent=39 // pred_check
          %p261 = pneg %p108
        $region54: #{tpu_custom_call.1} parent=39 // pred_check_branch
          %263 = sbr.rel (%p261) target = $region56
        $region55: #{tpu_custom_call.1} parent=39 // pred_region
          %264 = dma.done [#allocation9], 1024
        $region56: #{tpu_custom_call.1} parent=39 // pred_fallthru
          _
        %s265 = sand.u32 %s32, 1
        %s266 = scalar_lea.sflag [#allocation3], %s265
        %s267 = sand.u32 %s32, 1
        %s268 = smul.addr %s267, 128
        %s269 = scalar_lea.vmem [#allocation2], %s268
        %p270 = pneg %p45
        %p271 = pneg %p42
        %p272 = pneg %p66
        %p273 = pneg %p63
        %p274 = pneg %p87
        %p275 = pneg %p84
        %p276 = pneg %p108
        %p277 = pneg %p105
        %p278 = pneg %p129
        %p279 = pneg %p126
        %p280 = pneg %p155
        %p281 = pneg %p152
        %s282 = sand.u32 %s142, 1
        %s283 = scalar_lea.sflag [#allocation4], %s282
        %s284 = sand.u32 %s142, 1
        %s285 = smul.addr %s284, 128
        %s286 = scalar_lea.vmem [#allocation10], %s285
        %v288 = vld [vmem:[%s248] sm:$0xff]
        %v289 = vld [vmem:[%s248 + $0x8] sm:$0xff]
        %v290 = vld [vmem:[%s248 + $0x10] sm:$0xff]
        %v291 = vld [vmem:[%s248 + $0x18] sm:$0xff]
        %v292 = vld [vmem:[%s248 + $0x20] sm:$0xff]
        %v293 = vld [vmem:[%s248 + $0x28] sm:$0xff]
        %v294 = vld [vmem:[%s248 + $0x30] sm:$0xff]
        %v295 = vld [vmem:[%s248 + $0x38] sm:$0xff]
        %v296 = vld [vmem:[%s248 + $0x40] sm:$0xff]
        %v297 = vld [vmem:[%s248 + $0x48] sm:$0xff]
        %v298 = vld [vmem:[%s248 + $0x50] sm:$0xff]
        %v299 = vld [vmem:[%s248 + $0x58] sm:$0xff]
        %v300 = vld [vmem:[%s248 + $0x60] sm:$0xff]
        %v301 = vld [vmem:[%s248 + $0x68] sm:$0xff]
        %v302 = vld [vmem:[%s248 + $0x70] sm:$0xff]
        %v303 = vld [vmem:[%s248 + $0x78] sm:$0xff]
        %v304 = vpack.c.bf16 %v289, %v288
        %v305 = vpack.c.bf16 %v291, %v290
        %v306 = vpack.c.bf16 %v293, %v292
        %v307 = vpack.c.bf16 %v295, %v294
        %v308 = vpack.c.bf16 %v297, %v296
        %v309 = vpack.c.bf16 %v299, %v298
        %v310 = vpack.c.bf16 %v301, %v300
        %v311 = vpack.c.bf16 %v303, %v302
        %v312 = vld [vmem:[#allocation5] sm:$0xff]
        %v313 = vld [vmem:[#allocation5 + $0x8] sm:$0xf]
        %v314 = vld [vmem:[#allocation5 + $0xc] sm:$0xff]
        %v315 = vld [vmem:[#allocation5 + $0x14] sm:$0xf]
        %v316 = vld [vmem:[#allocation5 + $0x18] sm:$0xff]
        %v317 = vld [vmem:[#allocation5 + $0x20] sm:$0xf]
        %v318 = vld [vmem:[#allocation5 + $0x24] sm:$0xff]
        %v319 = vld [vmem:[#allocation5 + $0x2c] sm:$0xf]
        %v320 = vld [vmem:[#allocation5 + $0x30] sm:$0xff]
        %v321 = vld [vmem:[#allocation5 + $0x38] sm:$0xf]
        %v322 = vld [vmem:[#allocation5 + $0x3c] sm:$0xff]
        %v323 = vld [vmem:[#allocation5 + $0x44] sm:$0xf]
        %v324 = vld [vmem:[#allocation5 + $0x48] sm:$0xff]
        %v325 = vld [vmem:[#allocation5 + $0x50] sm:$0xf]
        %v326 = vld [vmem:[#allocation5 + $0x54] sm:$0xff]
        %v327 = vld [vmem:[#allocation5 + $0x5c] sm:$0xf]
        %v328 = vld [vmem:[#allocation5 + $0x60] sm:$0xff]
        %v329 = vld [vmem:[#allocation5 + $0x68] sm:$0xf]
        %v330 = vld [vmem:[#allocation5 + $0x6c] sm:$0xff]
        %v331 = vld [vmem:[#allocation5 + $0x74] sm:$0xf]
        %v332 = vld [vmem:[#allocation5 + $0x78] sm:$0xff]
        %v333 = vld [vmem:[#allocation5 + $0x80] sm:$0xf]
        %v334 = vld [vmem:[#allocation5 + $0x84] sm:$0xff]
        %v335 = vld [vmem:[#allocation5 + $0x8c] sm:$0xf]
        %v336 = vld [vmem:[#allocation5 + $0x90] sm:$0xff]
        %v337 = vld [vmem:[#allocation5 + $0x98] sm:$0xf]
        %v338 = vld [vmem:[#allocation5 + $0x9c] sm:$0xff]
        %v339 = vld [vmem:[#allocation5 + $0xa4] sm:$0xf]
        %v340 = vld [vmem:[#allocation5 + $0xa8] sm:$0xff]
        %v341 = vld [vmem:[#allocation5 + $0xb0] sm:$0xf]
        %v342 = vld [vmem:[#allocation5 + $0xb4] sm:$0xff]
        %v343 = vld [vmem:[#allocation5 + $0xbc] sm:$0xf]
        %v376 = vunpack.c.l.b16 %v312
        %v377 = vunpack.c.h.b16 %v312
        %v378 = vunpack.c.l.b16 %v313
        %v379 = vunpack.c.l.b16 %v314
        %v380 = vunpack.c.h.b16 %v314
        %v381 = vunpack.c.l.b16 %v315
        %v382 = vunpack.c.l.b16 %v316
        %v383 = vunpack.c.h.b16 %v316
        %v384 = vunpack.c.l.b16 %v317
        %v385 = vunpack.c.l.b16 %v318
        %v386 = vunpack.c.h.b16 %v318
        %v387 = vunpack.c.l.b16 %v319
        %v388 = vunpack.c.l.b16 %v320
        %v389 = vunpack.c.h.b16 %v320
        %v390 = vunpack.c.l.b16 %v321
        %v391 = vunpack.c.l.b16 %v322
        %v392 = vunpack.c.h.b16 %v322
        %v393 = vunpack.c.l.b16 %v323
        %v394 = vunpack.c.l.b16 %v324
        %v395 = vunpack.c.h.b16 %v324
        %v396 = vunpack.c.l.b16 %v325
        %v397 = vunpack.c.l.b16 %v326
        %v398 = vunpack.c.h.b16 %v326
        %v399 = vunpack.c.l.b16 %v327
        %v400 = vunpack.c.l.b16 %v328
        %v401 = vunpack.c.h.b16 %v328
        %v402 = vunpack.c.l.b16 %v329
        %v403 = vunpack.c.l.b16 %v330
        %v404 = vunpack.c.h.b16 %v330
        %v405 = vunpack.c.l.b16 %v331
        %v406 = vunpack.c.l.b16 %v332
        %v407 = vunpack.c.h.b16 %v332
        %v408 = vunpack.c.l.b16 %v333
        %v409 = vunpack.c.l.b16 %v334
        %v410 = vunpack.c.h.b16 %v334
        %v411 = vunpack.c.l.b16 %v335
        %v412 = vunpack.c.l.b16 %v336
        %v413 = vunpack.c.h.b16 %v336
        %v414 = vunpack.c.l.b16 %v337
        %v415 = vunpack.c.l.b16 %v338
        %v416 = vunpack.c.h.b16 %v338
        %v417 = vunpack.c.l.b16 %v339
        %v418 = vunpack.c.l.b16 %v340
        %v419 = vunpack.c.h.b16 %v340
        %v420 = vunpack.c.l.b16 %v341
        %v421 = vunpack.c.l.b16 %v342
        %v422 = vunpack.c.h.b16 %v342
        %v423 = vunpack.c.l.b16 %v343
        %v424 = vpack.c.b16 %v379, %v376
        %v425 = vpack.c.b16 %v380, %v377
        %v426 = vpack.c.b16 %v381, %v378
        %v427 = vpack.c.b16 %v385, %v382
        %v428 = vpack.c.b16 %v386, %v383
        %v429 = vpack.c.b16 %v387, %v384
        %v430 = vpack.c.b16 %v391, %v388
        %v431 = vpack.c.b16 %v392, %v389
        %v432 = vpack.c.b16 %v393, %v390
        %v433 = vpack.c.b16 %v397, %v394
        %v434 = vpack.c.b16 %v398, %v395
        %v435 = vpack.c.b16 %v399, %v396
        %v436 = vpack.c.b16 %v403, %v400
        %v437 = vpack.c.b16 %v404, %v401
        %v438 = vpack.c.b16 %v405, %v402
        %v439 = vpack.c.b16 %v409, %v406
        %v440 = vpack.c.b16 %v410, %v407
        %v441 = vpack.c.b16 %v411, %v408
        %v442 = vpack.c.b16 %v415, %v412
        %v443 = vpack.c.b16 %v416, %v413
        %v444 = vpack.c.b16 %v417, %v414
        %v445 = vpack.c.b16 %v421, %v418
        %v446 = vpack.c.b16 %v422, %v419
        %v447 = vpack.c.b16 %v423, %v420
        %472 = vmatprep.subr.bf16.mxu0 %v425
        %473 = vmatpush1.bf16.msra.mxu0 %v424
        %474 = vmatprep.subr.bf16.mxu0 %v428
        %475 = vmatpush1.bf16.msra.mxu0 %v427
        %476 = vmatprep.subr.bf16.mxu0 %v431
        %477 = vmatpush1.bf16.msra.mxu0 %v430
        %478 = vmatprep.subr.bf16.mxu0 %v434
        %479 = vmatpush1.bf16.msra.mxu0 %v433
        %480 = vmatprep.subr.bf16.mxu0 %v437
        %481 = vmatpush1.bf16.msra.mxu0 %v436
        %482 = vmatprep.subr.bf16.mxu0 %v440
        %483 = vmatpush1.bf16.msra.mxu0 %v439
        %484 = vmatprep.subr.bf16.mxu0 %v443
        %485 = vmatpush1.bf16.msra.mxu0 %v442
        %486 = vmatprep.subr.bf16.mxu0 %v446
        %487 = vmatpush1.bf16.msra.mxu0 %v445
        %488 = vmatprep.subr.bf16.mxu0 0
        %489 = vmatpush1.bf16.msra.mxu0 0
        %490 = vmatprep.subr.bf16.mxu0 0
        %491 = vmatpush1.bf16.msra.mxu0 0
        %492 = vmatprep.subr.bf16.mxu0 0
        %493 = vmatpush1.bf16.msra.mxu0 0
        %494 = vmatprep.subr.bf16.mxu0 0
        %495 = vmatpush1.bf16.msra.mxu0 0
        %496 = vmatprep.subr.bf16.mxu0 0
        %497 = vmatpush1.bf16.msra.mxu0 0
        %498 = vmatprep.subr.bf16.mxu0 0
        %499 = vmatpush1.bf16.msra.mxu0 0
        %500 = vmatprep.subr.bf16.mxu0 0
        %501 = vmatpush1.bf16.msra.mxu0 0
        %502 = vmatprep.subr.bf16.mxu0 0
        %503 = vmatpush1.bf16.msra.mxu0 0
        %504 = vmatprep.mubr.bf16.mxu0 0
        %505 = vmatmul.mubr.bf16.gmra.mrb[0].mxu0 %v304
        %v506 = vpop.f32.mrb[0].mxu0
        %v507 = vadd.f32 0.0, %v506
        %v508 = vpop.f32.mrb[0].mxu0
        %v509 = vadd.f32 0.0, %v508
        %v510 = vpop.f32.mrb[0].mxu0
        %v511 = vadd.f32 0.0, %v510
        %v512 = vpop.f32.mrb[0].mxu0
        %v513 = vadd.f32 0.0, %v512
        %514 = vmatprep.mubr.bf16.mxu0 0
        %515 = vmatmul.mubr.bf16.gmra.mrb[0].mxu0 %v305
        %v516 = vpop.f32.mrb[0].mxu0
        %v517 = vadd.f32 0.0, %v516
        %v518 = vpop.f32.mrb[0].mxu0
        %v519 = vadd.f32 0.0, %v518
        %v520 = vpop.f32.mrb[0].mxu0
        %v521 = vadd.f32 0.0, %v520
        %v522 = vpop.f32.mrb[0].mxu0
        %v523 = vadd.f32 0.0, %v522
        %524 = vmatprep.mubr.bf16.mxu0 0
        %525 = vmatmul.mubr.bf16.gmra.mrb[0].mxu0 %v306
        %v526 = vpop.f32.mrb[0].mxu0
        %v527 = vadd.f32 0.0, %v526
        %v528 = vpop.f32.mrb[0].mxu0
        %v529 = vadd.f32 0.0, %v528
        %v530 = vpop.f32.mrb[0].mxu0
        %v531 = vadd.f32 0.0, %v530
        %v532 = vpop.f32.mrb[0].mxu0
        %v533 = vadd.f32 0.0, %v532
        %534 = vmatprep.mubr.bf16.mxu0 0
        %535 = vmatmul.mubr.bf16.gmra.mrb[0].mxu0 %v307
        %v536 = vpop.f32.mrb[0].mxu0
        %v537 = vadd.f32 0.0, %v536
        %v538 = vpop.f32.mrb[0].mxu0
        %v539 = vadd.f32 0.0, %v538
        %v540 = vpop.f32.mrb[0].mxu0
        %v541 = vadd.f32 0.0, %v540
        %v542 = vpop.f32.mrb[0].mxu0
        %v543 = vadd.f32 0.0, %v542
        %544 = vmatprep.mubr.bf16.mxu0 0
        %545 = vmatmul.mubr.bf16.gmra.mrb[0].mxu0 %v308
        %v546 = vpop.f32.mrb[0].mxu0
        %v547 = vadd.f32 0.0, %v546
        %v548 = vpop.f32.mrb[0].mxu0
        %v549 = vadd.f32 0.0, %v548
        %v550 = vpop.f32.mrb[0].mxu0
        %v551 = vadd.f32 0.0, %v550
        %v552 = vpop.f32.mrb[0].mxu0
        %v553 = vadd.f32 0.0, %v552
        %554 = vmatprep.mubr.bf16.mxu0 0
        %555 = vmatmul.mubr.bf16.gmra.mrb[0].mxu0 %v309
        %v556 = vpop.f32.mrb[0].mxu0
        %v557 = vadd.f32 0.0, %v556
        %v558 = vpop.f32.mrb[0].mxu0
        %v559 = vadd.f32 0.0, %v558
        %v560 = vpop.f32.mrb[0].mxu0
        %v561 = vadd.f32 0.0, %v560
        %v562 = vpop.f32.mrb[0].mxu0
        %v563 = vadd.f32 0.0, %v562
        %564 = vmatprep.mubr.bf16.mxu0 0
        %565 = vmatmul.mubr.bf16.gmra.mrb[0].mxu0 %v310
        %v566 = vpop.f32.mrb[0].mxu0
        %v567 = vadd.f32 0.0, %v566
        %v568 = vpop.f32.mrb[0].mxu0
        %v569 = vadd.f32 0.0, %v568
        %v570 = vpop.f32.mrb[0].mxu0
        %v571 = vadd.f32 0.0, %v570
        %v572 = vpop.f32.mrb[0].mxu0
        %v573 = vadd.f32 0.0, %v572
        %574 = vmatprep.mubr.bf16.mxu0 0
        %575 = vmatmul.mubr.bf16.gmra.mrb[0].mxu0 %v311
        %v576 = vpop.f32.mrb[0].mxu0
        %v577 = vadd.f32 0.0, %v576
        %v578 = vpop.f32.mrb[0].mxu0
        %v579 = vadd.f32 0.0, %v578
        %v580 = vpop.f32.mrb[0].mxu0
        %v581 = vadd.f32 0.0, %v580
        %v582 = vpop.f32.mrb[0].mxu0
        %v583 = vadd.f32 0.0, %v582
        %584 = vdwg.mxu0
        %585 = vmatprep.subr.bf16.mxu0 0
        %586 = vmatpush1.bf16.msra.mxu0 %v426
        %587 = vmatprep.subr.bf16.mxu0 0
        %588 = vmatpush1.bf16.msra.mxu0 %v429
        %589 = vmatprep.subr.bf16.mxu0 0
        %590 = vmatpush1.bf16.msra.mxu0 %v432
        %591 = vmatprep.subr.bf16.mxu0 0
        %592 = vmatpush1.bf16.msra.mxu0 %v435
        %593 = vmatprep.subr.bf16.mxu0 0
        %594 = vmatpush1.bf16.msra.mxu0 %v438
        %595 = vmatprep.subr.bf16.mxu0 0
        %596 = vmatpush1.bf16.msra.mxu0 %v441
        %597 = vmatprep.subr.bf16.mxu0 0
        %598 = vmatpush1.bf16.msra.mxu0 %v444
        %599 = vmatprep.subr.bf16.mxu0 0
        %600 = vmatpush1.bf16.msra.mxu0 %v447
        %601 = vmatprep.subr.bf16.mxu0 0
        %602 = vmatpush1.bf16.msra.mxu0 0
        %603 = vmatprep.subr.bf16.mxu0 0
        %604 = vmatpush1.bf16.msra.mxu0 0
        %605 = vmatprep.subr.bf16.mxu0 0
        %606 = vmatpush1.bf16.msra.mxu0 0
        %607 = vmatprep.subr.bf16.mxu0 0
        %608 = vmatpush1.bf16.msra.mxu0 0
        %609 = vmatprep.subr.bf16.mxu0 0
        %610 = vmatpush1.bf16.msra.mxu0 0
        %611 = vmatprep.subr.bf16.mxu0 0
        %612 = vmatpush1.bf16.msra.mxu0 0
        %613 = vmatprep.subr.bf16.mxu0 0
        %614 = vmatpush1.bf16.msra.mxu0 0
        %615 = vmatprep.subr.bf16.mxu0 0
        %616 = vmatpush1.bf16.msra.mxu0 0
        %617 = vmatprep.mubr.bf16.mxu0 0
        %618 = vmatmul.mubr.bf16.gmra.mrb[0].mxu0 %v304
        %v619 = vpop.f32.mrb[0].mxu0
        %v620 = vadd.f32 0.0, %v619
        %v621 = vpop.f32.mrb[0].mxu0
        %v622 = vpop.f32.mrb[0].mxu0
        %v623 = vadd.f32 0.0, %v622
        %v624 = vpop.f32.mrb[0].mxu0
        %625 = vmatprep.mubr.bf16.mxu0 0
        %626 = vmatmul.mubr.bf16.gmra.mrb[0].mxu0 %v305
        %v627 = vpop.f32.mrb[0].mxu0
        %v628 = vadd.f32 0.0, %v627
        %v629 = vpop.f32.mrb[0].mxu0
        %v630 = vpop.f32.mrb[0].mxu0
        %v631 = vadd.f32 0.0, %v630
        %v632 = vpop.f32.mrb[0].mxu0
        %633 = vmatprep.mubr.bf16.mxu0 0
        %634 = vmatmul.mubr.bf16.gmra.mrb[0].mxu0 %v306
        %v635 = vpop.f32.mrb[0].mxu0
        %v636 = vadd.f32 0.0, %v635
        %v637 = vpop.f32.mrb[0].mxu0
        %v638 = vpop.f32.mrb[0].mxu0
        %v639 = vadd.f32 0.0, %v638
        %v640 = vpop.f32.mrb[0].mxu0
        %641 = vmatprep.mubr.bf16.mxu0 0
        %642 = vmatmul.mubr.bf16.gmra.mrb[0].mxu0 %v307
        %v643 = vpop.f32.mrb[0].mxu0
        %v644 = vadd.f32 0.0, %v643
        %v645 = vpop.f32.mrb[0].mxu0
        %v646 = vpop.f32.mrb[0].mxu0
        %v647 = vadd.f32 0.0, %v646
        %v648 = vpop.f32.mrb[0].mxu0
        %649 = vmatprep.mubr.bf16.mxu0 0
        %650 = vmatmul.mubr.bf16.gmra.mrb[0].mxu0 %v308
        %v651 = vpop.f32.mrb[0].mxu0
        %v652 = vadd.f32 0.0, %v651
        %v653 = vpop.f32.mrb[0].mxu0
        %v654 = vpop.f32.mrb[0].mxu0
        %v655 = vadd.f32 0.0, %v654
        %v656 = vpop.f32.mrb[0].mxu0
        %657 = vmatprep.mubr.bf16.mxu0 0
        %658 = vmatmul.mubr.bf16.gmra.mrb[0].mxu0 %v309
        %v659 = vpop.f32.mrb[0].mxu0
        %v660 = vadd.f32 0.0, %v659
        %v661 = vpop.f32.mrb[0].mxu0
        %v662 = vpop.f32.mrb[0].mxu0
        %v663 = vadd.f32 0.0, %v662
        %v664 = vpop.f32.mrb[0].mxu0
        %665 = vmatprep.mubr.bf16.mxu0 0
        %666 = vmatmul.mubr.bf16.gmra.mrb[0].mxu0 %v310
        %v667 = vpop.f32.mrb[0].mxu0
        %v668 = vadd.f32 0.0, %v667
        %v669 = vpop.f32.mrb[0].mxu0
        %v670 = vpop.f32.mrb[0].mxu0
        %v671 = vadd.f32 0.0, %v670
        %v672 = vpop.f32.mrb[0].mxu0
        %673 = vmatprep.mubr.bf16.mxu0 0
        %674 = vmatmul.mubr.bf16.gmra.mrb[0].mxu0 %v311
        %v675 = vpop.f32.mrb[0].mxu0
        %v676 = vadd.f32 0.0, %v675
        %v677 = vpop.f32.mrb[0].mxu0
        %v678 = vpop.f32.mrb[0].mxu0
        %v679 = vadd.f32 0.0, %v678
        %v680 = vpop.f32.mrb[0].mxu0
        %681 = vdwg.mxu0
        %v682 = vmul.f32 %v507, 0.125
        %v683 = vmul.f32 %v511, 0.125
        %v684 = vmul.f32 %v517, 0.125
        %v685 = vmul.f32 %v521, 0.125
        %v686 = vmul.f32 %v527, 0.125
        %v687 = vmul.f32 %v531, 0.125
        %v688 = vmul.f32 %v537, 0.125
        %v689 = vmul.f32 %v541, 0.125
        %v690 = vmul.f32 %v547, 0.125
        %v691 = vmul.f32 %v551, 0.125
        %v692 = vmul.f32 %v557, 0.125
        %v693 = vmul.f32 %v561, 0.125
        %v694 = vmul.f32 %v567, 0.125
        %v695 = vmul.f32 %v571, 0.125
        %v696 = vmul.f32 %v577, 0.125
        %v697 = vmul.f32 %v581, 0.125
        %v698 = vpack.c.bf16 %v683, %v682
        %v699 = vpack.c.bf16 %v685, %v684
        %v700 = vpack.c.bf16 %v687, %v686
        %v701 = vpack.c.bf16 %v689, %v688
        %v702 = vpack.c.bf16 %v691, %v690
        %v703 = vpack.c.bf16 %v693, %v692
        %v704 = vpack.c.bf16 %v695, %v694
        %v705 = vpack.c.bf16 %v697, %v696
        %v706 = vpack.c.bf16 %v513, %v509
        %v707 = vpack.c.bf16 %v523, %v519
        %v708 = vpack.c.bf16 %v533, %v529
        %v709 = vpack.c.bf16 %v543, %v539
        %v710 = vpack.c.bf16 %v553, %v549
        %v711 = vpack.c.bf16 %v563, %v559
        %v712 = vpack.c.bf16 %v573, %v569
        %v713 = vpack.c.bf16 %v583, %v579
        %v714 = vpack.c.bf16 %v623, %v620
        %v715 = vpack.c.bf16 %v631, %v628
        %v716 = vpack.c.bf16 %v639, %v636
        %v717 = vpack.c.bf16 %v647, %v644
        %v718 = vpack.c.bf16 %v655, %v652
        %v719 = vpack.c.bf16 %v663, %v660
        %v720 = vpack.c.bf16 %v671, %v668
        %v721 = vpack.c.bf16 %v679, %v676
        %v722 = vld [vmem:[#allocation7] sm:$0xff]
        %v723 = vld [vmem:[#allocation7 + $0x8] sm:$0xff]
        %v724 = vld [vmem:[#allocation7 + $0x10] sm:$0xff]
        %v725 = vld [vmem:[#allocation7 + $0x18] sm:$0xff]
        %v726 = vld [vmem:[#allocation7 + $0x20] sm:$0xff]
        %v727 = vld [vmem:[#allocation7 + $0x28] sm:$0xff]
        %v728 = vld [vmem:[#allocation7 + $0x30] sm:$0xff]
        %v729 = vld [vmem:[#allocation7 + $0x38] sm:$0xff]
        %v730 = vld [vmem:[#allocation7 + $0x40] sm:$0xff]
        %v731 = vld [vmem:[#allocation7 + $0x48] sm:$0xff]
        %v732 = vld [vmem:[#allocation7 + $0x50] sm:$0xff]
        %v733 = vld [vmem:[#allocation7 + $0x58] sm:$0xff]
        %v734 = vld [vmem:[#allocation7 + $0x60] sm:$0xff]
        %v735 = vld [vmem:[#allocation7 + $0x68] sm:$0xff]
        %v736 = vld [vmem:[#allocation7 + $0x70] sm:$0xff]
        %v737 = vld [vmem:[#allocation7 + $0x78] sm:$0xff]
        %vm738 = vcmask 523264
        %v740 = vsel %vm738, %v698, 0
        %v743 = vsel %vm738, %v699, 0
        %v746 = vsel %vm738, %v700, 0
        %v749 = vsel %vm738, %v701, 0
        %v752 = vsel %vm738, %v702, 0
        %v755 = vsel %vm738, %v703, 0
        %v758 = vsel %vm738, %v704, 0
        %v761 = vsel %vm738, %v705, 0
        %v764 = vsel %vm738, %v706, 0
        %v767 = vsel %vm738, %v707, 0
        %v770 = vsel %vm738, %v708, 0
        %v773 = vsel %vm738, %v709, 0
        %v776 = vsel %vm738, %v710, 0
        %v779 = vsel %vm738, %v711, 0
        %v782 = vsel %vm738, %v712, 0
        %v785 = vsel %vm738, %v713, 0
        %787 = vmatprep.subr.bf16.mxu0 0
        %788 = vmatpush1.bf16.xpose.msra.mxu0 %v764
        %789 = vmatprep.subr.bf16.mxu0 0
        %790 = vmatpush1.bf16.xpose.msra.mxu0 %v767
        %791 = vmatprep.subr.bf16.mxu0 0
        %792 = vmatpush1.bf16.xpose.msra.mxu0 %v770
        %793 = vmatprep.subr.bf16.mxu0 0
        %794 = vmatpush1.bf16.xpose.msra.mxu0 %v773
        %795 = vmatprep.subr.bf16.mxu0 0
        %796 = vmatpush1.bf16.xpose.msra.mxu0 %v776
        %797 = vmatprep.subr.bf16.mxu0 0
        %798 = vmatpush1.bf16.xpose.msra.mxu0 %v779
        %799 = vmatprep.subr.bf16.mxu0 0
        %800 = vmatpush1.bf16.xpose.msra.mxu0 %v782
        %801 = vmatprep.subr.bf16.mxu0 0
        %802 = vmatpush1.bf16.xpose.msra.mxu0 %v785
        %803 = vmatprep.subr.bf16.mxu0 0
        %804 = vmatpush1.bf16.xpose.msra.mxu0 0
        %805 = vmatprep.subr.bf16.mxu0 0
        %806 = vmatpush1.bf16.xpose.msra.mxu0 0
        %807 = vmatprep.subr.bf16.mxu0 0
        %808 = vmatpush1.bf16.xpose.msra.mxu0 0
        %809 = vmatprep.subr.bf16.mxu0 0
        %810 = vmatpush1.bf16.xpose.msra.mxu0 0
        %811 = vmatprep.subr.bf16.mxu0 0
        %812 = vmatpush1.bf16.xpose.msra.mxu0 0
        %813 = vmatprep.subr.bf16.mxu0 0
        %814 = vmatpush1.bf16.xpose.msra.mxu0 0
        %815 = vmatprep.subr.bf16.mxu0 0
        %816 = vmatpush1.bf16.xpose.msra.mxu0 0
        %817 = vmatprep.subr.bf16.mxu0 0
        %818 = vmatpush1.bf16.xpose.msra.mxu0 0
        %819 = vmatprep.mubr.bf16.mxu0 0
        %820 = vmatmul.mubr.bf16.gmra.mrb[0].mxu0 %v740
        %v821 = vpop.f32.mrb[0].mxu0
        %v822 = vadd.f32 %v722, %v821
        %v823 = vpop.f32.mrb[0].mxu0
        %v824 = vpop.f32.mrb[0].mxu0
        %v825 = vadd.f32 %v723, %v824
        %v826 = vpop.f32.mrb[0].mxu0
        %827 = vmatprep.mubr.bf16.mxu0 0
        %828 = vmatmul.mubr.bf16.gmra.mrb[0].mxu0 %v743
        %v829 = vpop.f32.mrb[0].mxu0
        %v830 = vadd.f32 %v724, %v829
        %v831 = vpop.f32.mrb[0].mxu0
        %v832 = vpop.f32.mrb[0].mxu0
        %v833 = vadd.f32 %v725, %v832
        %v834 = vpop.f32.mrb[0].mxu0
        %835 = vmatprep.mubr.bf16.mxu0 0
        %836 = vmatmul.mubr.bf16.gmra.mrb[0].mxu0 %v746
        %v837 = vpop.f32.mrb[0].mxu0
        %v838 = vadd.f32 %v726, %v837
        %v839 = vpop.f32.mrb[0].mxu0
        %v840 = vpop.f32.mrb[0].mxu0
        %v841 = vadd.f32 %v727, %v840
        %v842 = vpop.f32.mrb[0].mxu0
        %843 = vmatprep.mubr.bf16.mxu0 0
        %844 = vmatmul.mubr.bf16.gmra.mrb[0].mxu0 %v749
        %v845 = vpop.f32.mrb[0].mxu0
        %v846 = vadd.f32 %v728, %v845
        %v847 = vpop.f32.mrb[0].mxu0
        %v848 = vpop.f32.mrb[0].mxu0
        %v849 = vadd.f32 %v729, %v848
        %v850 = vpop.f32.mrb[0].mxu0
        %851 = vmatprep.mubr.bf16.mxu0 0
        %852 = vmatmul.mubr.bf16.gmra.mrb[0].mxu0 %v752
        %v853 = vpop.f32.mrb[0].mxu0
        %v854 = vadd.f32 %v730, %v853
        %v855 = vpop.f32.mrb[0].mxu0
        %v856 = vpop.f32.mrb[0].mxu0
        %v857 = vadd.f32 %v731, %v856
        %v858 = vpop.f32.mrb[0].mxu0
        %859 = vmatprep.mubr.bf16.mxu0 0
        %860 = vmatmul.mubr.bf16.gmra.mrb[0].mxu0 %v755
        %v861 = vpop.f32.mrb[0].mxu0
        %v862 = vadd.f32 %v732, %v861
        %v863 = vpop.f32.mrb[0].mxu0
        %v864 = vpop.f32.mrb[0].mxu0
        %v865 = vadd.f32 %v733, %v864
        %v866 = vpop.f32.mrb[0].mxu0
        %867 = vmatprep.mubr.bf16.mxu0 0
        %868 = vmatmul.mubr.bf16.gmra.mrb[0].mxu0 %v758
        %v869 = vpop.f32.mrb[0].mxu0
        %v870 = vadd.f32 %v734, %v869
        %v871 = vpop.f32.mrb[0].mxu0
        %v872 = vpop.f32.mrb[0].mxu0
        %v873 = vadd.f32 %v735, %v872
        %v874 = vpop.f32.mrb[0].mxu0
        %875 = vmatprep.mubr.bf16.mxu0 0
        %876 = vmatmul.mubr.bf16.gmra.mrb[0].mxu0 %v761
        %v877 = vpop.f32.mrb[0].mxu0
        %v878 = vadd.f32 %v736, %v877
        %v879 = vpop.f32.mrb[0].mxu0
        %v880 = vpop.f32.mrb[0].mxu0
        %v881 = vadd.f32 %v737, %v880
        %v882 = vpop.f32.mrb[0].mxu0
        %883 = vdwg.mxu0
        %884 = vmax.xlane.f32.xlu0 %v822
        %v885 = vpop.xlane.xlu0 %884
        %886 = vmax.xlane.f32.xlu0 %v825
        %v887 = vpop.xlane.xlu0 %886
        %888 = vmax.xlane.f32.xlu0 %v830
        %v889 = vpop.xlane.xlu0 %888
        %890 = vmax.xlane.f32.xlu0 %v833
        %v891 = vpop.xlane.xlu0 %890
        %892 = vmax.xlane.f32.xlu0 %v838
        %v893 = vpop.xlane.xlu0 %892
        %894 = vmax.xlane.f32.xlu0 %v841
        %v895 = vpop.xlane.xlu0 %894
        %896 = vmax.xlane.f32.xlu0 %v846
        %v897 = vpop.xlane.xlu0 %896
        %898 = vmax.xlane.f32.xlu0 %v849
        %v899 = vpop.xlane.xlu0 %898
        %900 = vmax.xlane.f32.xlu0 %v854
        %v901 = vpop.xlane.xlu0 %900
        %902 = vmax.xlane.f32.xlu0 %v857
        %v903 = vpop.xlane.xlu0 %902
        %904 = vmax.xlane.f32.xlu0 %v862
        %v905 = vpop.xlane.xlu0 %904
        %906 = vmax.xlane.f32.xlu0 %v865
        %v907 = vpop.xlane.xlu0 %906
        %908 = vmax.xlane.f32.xlu0 %v870
        %v909 = vpop.xlane.xlu0 %908
        %910 = vmax.xlane.f32.xlu0 %v873
        %v911 = vpop.xlane.xlu0 %910
        %912 = vmax.xlane.f32.xlu0 %v878
        %v913 = vpop.xlane.xlu0 %912
        %914 = vmax.xlane.f32.xlu0 %v881
        %v915 = vpop.xlane.xlu0 %914
        %v916 = vsub.f32 %v822, %v885
        %v917 = vsub.f32 %v825, %v887
        %v918 = vsub.f32 %v830, %v889
        %v919 = vsub.f32 %v833, %v891
        %v920 = vsub.f32 %v838, %v893
        %v921 = vsub.f32 %v841, %v895
        %v922 = vsub.f32 %v846, %v897
        %v923 = vsub.f32 %v849, %v899
        %v924 = vsub.f32 %v854, %v901
        %v925 = vsub.f32 %v857, %v903
        %v926 = vsub.f32 %v862, %v905
        %v927 = vsub.f32 %v865, %v907
        %v928 = vsub.f32 %v870, %v909
        %v929 = vsub.f32 %v873, %v911
        %v930 = vsub.f32 %v878, %v913
        %v931 = vsub.f32 %v881, %v915
        %v932 = vmul.f32 %v916, 1.442695
        %v933 = vpow.pop %v932
        %v934 = vmul.f32 %v917, 1.442695
        %v935 = vpow.pop %v934
        %v936 = vmul.f32 %v918, 1.442695
        %v937 = vpow.pop %v936
        %v938 = vmul.f32 %v919, 1.442695
        %v939 = vpow.pop %v938
        %v940 = vmul.f32 %v920, 1.442695
        %v941 = vpow.pop %v940
        %v942 = vmul.f32 %v921, 1.442695
        %v943 = vpow.pop %v942
        %v944 = vmul.f32 %v922, 1.442695
        %v945 = vpow.pop %v944
        %v946 = vmul.f32 %v923, 1.442695
        %v947 = vpow.pop %v946
        %v948 = vmul.f32 %v924, 1.442695
        %v949 = vpow.pop %v948
        %v950 = vmul.f32 %v925, 1.442695
        %v951 = vpow.pop %v950
        %v952 = vmul.f32 %v926, 1.442695
        %v953 = vpow.pop %v952
        %v954 = vmul.f32 %v927, 1.442695
        %v955 = vpow.pop %v954
        %v956 = vmul.f32 %v928, 1.442695
        %v957 = vpow.pop %v956
        %v958 = vmul.f32 %v929, 1.442695
        %v959 = vpow.pop %v958
        %v960 = vmul.f32 %v930, 1.442695
        %v961 = vpow.pop %v960
        %v962 = vmul.f32 %v931, 1.442695
        %v963 = vpow.pop %v962
        %964 = vadd.xlane.f32.xlu0 %v933
        %v965 = vpop.xlane.xlu0 %964
        %966 = vadd.xlane.f32.xlu0 %v935
        %v967 = vpop.xlane.xlu0 %966
        %968 = vadd.xlane.f32.xlu0 %v937
        %v969 = vpop.xlane.xlu0 %968
        %970 = vadd.xlane.f32.xlu0 %v939
        %v971 = vpop.xlane.xlu0 %970
        %972 = vadd.xlane.f32.xlu0 %v941
        %v973 = vpop.xlane.xlu0 %972
        %974 = vadd.xlane.f32.xlu0 %v943
        %v975 = vpop.xlane.xlu0 %974
        %976 = vadd.xlane.f32.xlu0 %v945
        %v977 = vpop.xlane.xlu0 %976
        %978 = vadd.xlane.f32.xlu0 %v947
        %v979 = vpop.xlane.xlu0 %978
        %980 = vadd.xlane.f32.xlu0 %v949
        %v981 = vpop.xlane.xlu0 %980
        %982 = vadd.xlane.f32.xlu0 %v951
        %v983 = vpop.xlane.xlu0 %982
        %984 = vadd.xlane.f32.xlu0 %v953
        %v985 = vpop.xlane.xlu0 %984
        %986 = vadd.xlane.f32.xlu0 %v955
        %v987 = vpop.xlane.xlu0 %986
        %988 = vadd.xlane.f32.xlu0 %v957
        %v989 = vpop.xlane.xlu0 %988
        %990 = vadd.xlane.f32.xlu0 %v959
        %v991 = vpop.xlane.xlu0 %990
        %992 = vadd.xlane.f32.xlu0 %v961
        %v993 = vpop.xlane.xlu0 %992
        %994 = vadd.xlane.f32.xlu0 %v963
        %v995 = vpop.xlane.xlu0 %994
        %v996 = vrcp.pop %v965
        %v997 = vrcp.pop %v967
        %v998 = vrcp.pop %v969
        %v999 = vrcp.pop %v971
        %v1000 = vrcp.pop %v973
        %v1001 = vrcp.pop %v975
        %v1002 = vrcp.pop %v977
        %v1003 = vrcp.pop %v979
        %v1004 = vrcp.pop %v981
        %v1005 = vrcp.pop %v983
        %v1006 = vrcp.pop %v985
        %v1007 = vrcp.pop %v987
        %v1008 = vrcp.pop %v989
        %v1009 = vrcp.pop %v991
        %v1010 = vrcp.pop %v993
        %v1011 = vrcp.pop %v995
        %v1012 = vmul.f32 %v933, %v996
        %v1013 = vmul.f32 %v935, %v997
        %v1014 = vmul.f32 %v937, %v998
        %v1015 = vmul.f32 %v939, %v999
        %v1016 = vmul.f32 %v941, %v1000
        %v1017 = vmul.f32 %v943, %v1001
        %v1018 = vmul.f32 %v945, %v1002
        %v1019 = vmul.f32 %v947, %v1003
        %v1020 = vmul.f32 %v949, %v1004
        %v1021 = vmul.f32 %v951, %v1005
        %v1022 = vmul.f32 %v953, %v1006
        %v1023 = vmul.f32 %v955, %v1007
        %v1024 = vmul.f32 %v957, %v1008
        %v1025 = vmul.f32 %v959, %v1009
        %v1026 = vmul.f32 %v961, %v1010
        %v1027 = vmul.f32 %v963, %v1011
        %v1028 = vpack.c.bf16 %v1013, %v1012
        %v1029 = vpack.c.bf16 %v1015, %v1014
        %v1030 = vpack.c.bf16 %v1017, %v1016
        %v1031 = vpack.c.bf16 %v1019, %v1018
        %v1032 = vpack.c.bf16 %v1021, %v1020
        %v1033 = vpack.c.bf16 %v1023, %v1022
        %v1034 = vpack.c.bf16 %v1025, %v1024
        %v1035 = vpack.c.bf16 %v1027, %v1026
        %1036 = vmatprep.subr.bf16.mxu0 0
        %1037 = vmatpush1.bf16.msra.mxu0 %v714
        %1038 = vmatprep.subr.bf16.mxu0 0
        %1039 = vmatpush1.bf16.msra.mxu0 %v715
        %1040 = vmatprep.subr.bf16.mxu0 0
        %1041 = vmatpush1.bf16.msra.mxu0 %v716
        %1042 = vmatprep.subr.bf16.mxu0 0
        %1043 = vmatpush1.bf16.msra.mxu0 %v717
        %1044 = vmatprep.subr.bf16.mxu0 0
        %1045 = vmatpush1.bf16.msra.mxu0 %v718
        %1046 = vmatprep.subr.bf16.mxu0 0
        %1047 = vmatpush1.bf16.msra.mxu0 %v719
        %1048 = vmatprep.subr.bf16.mxu0 0
        %1049 = vmatpush1.bf16.msra.mxu0 %v720
        %1050 = vmatprep.subr.bf16.mxu0 0
        %1051 = vmatpush1.bf16.msra.mxu0 %v721
        %1052 = vmatprep.subr.bf16.mxu0 0
        %1053 = vmatpush1.bf16.msra.mxu0 0
        %1054 = vmatprep.subr.bf16.mxu0 0
        %1055 = vmatpush1.bf16.msra.mxu0 0
        %1056 = vmatprep.subr.bf16.mxu0 0
        %1057 = vmatpush1.bf16.msra.mxu0 0
        %1058 = vmatprep.subr.bf16.mxu0 0
        %1059 = vmatpush1.bf16.msra.mxu0 0
        %1060 = vmatprep.subr.bf16.mxu0 0
        %1061 = vmatpush1.bf16.msra.mxu0 0
        %1062 = vmatprep.subr.bf16.mxu0 0
        %1063 = vmatpush1.bf16.msra.mxu0 0
        %1064 = vmatprep.subr.bf16.mxu0 0
        %1065 = vmatpush1.bf16.msra.mxu0 0
        %1066 = vmatprep.subr.bf16.mxu0 0
        %1067 = vmatpush1.bf16.msra.mxu0 0
        %1068 = vmatprep.mubr.bf16.mxu0 0
        %1069 = vmatmul.mubr.bf16.gmra.mrb[0].mxu0 %v1028
        %v1070 = vpop.f32.mrb[0].mxu0
        %v1071 = vadd.f32 0.0, %v1070
        %v1072 = vpop.f32.mrb[0].mxu0
        %v1073 = vpop.f32.mrb[0].mxu0
        %v1074 = vadd.f32 0.0, %v1073
        %v1075 = vpop.f32.mrb[0].mxu0
        %1076 = vmatprep.mubr.bf16.mxu0 0
        %1077 = vmatmul.mubr.bf16.gmra.mrb[0].mxu0 %v1029
        %v1078 = vpop.f32.mrb[0].mxu0
        %v1079 = vadd.f32 0.0, %v1078
        %v1080 = vpop.f32.mrb[0].mxu0
        %v1081 = vpop.f32.mrb[0].mxu0
        %v1082 = vadd.f32 0.0, %v1081
        %v1083 = vpop.f32.mrb[0].mxu0
        %1084 = vmatprep.mubr.bf16.mxu0 0
        %1085 = vmatmul.mubr.bf16.gmra.mrb[0].mxu0 %v1030
        %v1086 = vpop.f32.mrb[0].mxu0
        %v1087 = vadd.f32 0.0, %v1086
        %v1088 = vpop.f32.mrb[0].mxu0
        %v1089 = vpop.f32.mrb[0].mxu0
        %v1090 = vadd.f32 0.0, %v1089
        %v1091 = vpop.f32.mrb[0].mxu0
        %1092 = vmatprep.mubr.bf16.mxu0 0
        %1093 = vmatmul.mubr.bf16.gmra.mrb[0].mxu0 %v1031
        %v1094 = vpop.f32.mrb[0].mxu0
        %v1095 = vadd.f32 0.0, %v1094
        %v1096 = vpop.f32.mrb[0].mxu0
        %v1097 = vpop.f32.mrb[0].mxu0
        %v1098 = vadd.f32 0.0, %v1097
        %v1099 = vpop.f32.mrb[0].mxu0
        %1100 = vmatprep.mubr.bf16.mxu0 0
        %1101 = vmatmul.mubr.bf16.gmra.mrb[0].mxu0 %v1032
        %v1102 = vpop.f32.mrb[0].mxu0
        %v1103 = vadd.f32 0.0, %v1102
        %v1104 = vpop.f32.mrb[0].mxu0
        %v1105 = vpop.f32.mrb[0].mxu0
        %v1106 = vadd.f32 0.0, %v1105
        %v1107 = vpop.f32.mrb[0].mxu0
        %1108 = vmatprep.mubr.bf16.mxu0 0
        %1109 = vmatmul.mubr.bf16.gmra.mrb[0].mxu0 %v1033
        %v1110 = vpop.f32.mrb[0].mxu0
        %v1111 = vadd.f32 0.0, %v1110
        %v1112 = vpop.f32.mrb[0].mxu0
        %v1113 = vpop.f32.mrb[0].mxu0
        %v1114 = vadd.f32 0.0, %v1113
        %v1115 = vpop.f32.mrb[0].mxu0
        %1116 = vmatprep.mubr.bf16.mxu0 0
        %1117 = vmatmul.mubr.bf16.gmra.mrb[0].mxu0 %v1034
        %v1118 = vpop.f32.mrb[0].mxu0
        %v1119 = vadd.f32 0.0, %v1118
        %v1120 = vpop.f32.mrb[0].mxu0
        %v1121 = vpop.f32.mrb[0].mxu0
        %v1122 = vadd.f32 0.0, %v1121
        %v1123 = vpop.f32.mrb[0].mxu0
        %1124 = vmatprep.mubr.bf16.mxu0 0
        %1125 = vmatmul.mubr.bf16.gmra.mrb[0].mxu0 %v1035
        %v1126 = vpop.f32.mrb[0].mxu0
        %v1127 = vadd.f32 0.0, %v1126
        %v1128 = vpop.f32.mrb[0].mxu0
        %v1129 = vpop.f32.mrb[0].mxu0
        %v1130 = vadd.f32 0.0, %v1129
        %v1131 = vpop.f32.mrb[0].mxu0
        %1132 = vdwg.mxu0
        %v1133 = vpack.c.bf16 %v1074, %v1071
        %v1134 = vpack.c.bf16 %v1082, %v1079
        %v1135 = vpack.c.bf16 %v1090, %v1087
        %v1136 = vpack.c.bf16 %v1098, %v1095
        %v1137 = vpack.c.bf16 %v1106, %v1103
        %v1138 = vpack.c.bf16 %v1114, %v1111
        %v1139 = vpack.c.bf16 %v1122, %v1119
        %v1140 = vpack.c.bf16 %v1130, %v1127
        %s1141 = scalar_lea.vmem [#allocation7], 128
        %v1142 = vld [vmem:[%s1141] sm:$0xff]
        %v1143 = vld [vmem:[%s1141 + $0x8] sm:$0xff]
        %v1144 = vld [vmem:[%s1141 + $0x10] sm:$0xff]
        %v1145 = vld [vmem:[%s1141 + $0x18] sm:$0xff]
        %v1146 = vld [vmem:[%s1141 + $0x20] sm:$0xff]
        %v1147 = vld [vmem:[%s1141 + $0x28] sm:$0xff]
        %v1148 = vld [vmem:[%s1141 + $0x30] sm:$0xff]
        %v1149 = vld [vmem:[%s1141 + $0x38] sm:$0xff]
        %v1150 = vld [vmem:[%s1141 + $0x40] sm:$0xff]
        %v1151 = vld [vmem:[%s1141 + $0x48] sm:$0xff]
        %v1152 = vld [vmem:[%s1141 + $0x50] sm:$0xff]
        %v1153 = vld [vmem:[%s1141 + $0x58] sm:$0xff]
        %v1154 = vld [vmem:[%s1141 + $0x60] sm:$0xff]
        %v1155 = vld [vmem:[%s1141 + $0x68] sm:$0xff]
        %v1156 = vld [vmem:[%s1141 + $0x70] sm:$0xff]
        %v1157 = vld [vmem:[%s1141 + $0x78] sm:$0xff]
        %1166 = vrot.lane.b32.xlu0 %v698, 64
        %v1167 = vpop.permute.xlu0 %1166
        %1168 = vrot.lane.b32.xlu0 %v699, 64
        %v1169 = vpop.permute.xlu0 %1168
        %1170 = vrot.lane.b32.xlu0 %v700, 64
        %v1171 = vpop.permute.xlu0 %1170
        %1172 = vrot.lane.b32.xlu0 %v701, 64
        %v1173 = vpop.permute.xlu0 %1172
        %1174 = vrot.lane.b32.xlu0 %v702, 64
        %v1175 = vpop.permute.xlu0 %1174
        %1176 = vrot.lane.b32.xlu0 %v703, 64
        %v1177 = vpop.permute.xlu0 %1176
        %1178 = vrot.lane.b32.xlu0 %v704, 64
        %v1179 = vpop.permute.xlu0 %1178
        %1180 = vrot.lane.b32.xlu0 %v705, 64
        %v1181 = vpop.permute.xlu0 %1180
        %1190 = vrot.lane.b32.xlu0 %v706, 64
        %v1191 = vpop.permute.xlu0 %1190
        %1192 = vrot.lane.b32.xlu0 %v707, 64
        %v1193 = vpop.permute.xlu0 %1192
        %1194 = vrot.lane.b32.xlu0 %v708, 64
        %v1195 = vpop.permute.xlu0 %1194
        %1196 = vrot.lane.b32.xlu0 %v709, 64
        %v1197 = vpop.permute.xlu0 %1196
        %1198 = vrot.lane.b32.xlu0 %v710, 64
        %v1199 = vpop.permute.xlu0 %1198
        %1200 = vrot.lane.b32.xlu0 %v711, 64
        %v1201 = vpop.permute.xlu0 %1200
        %1202 = vrot.lane.b32.xlu0 %v712, 64
        %v1203 = vpop.permute.xlu0 %1202
        %1204 = vrot.lane.b32.xlu0 %v713, 64
        %v1205 = vpop.permute.xlu0 %1204
        %v1207 = vsel %vm738, %v1167, 0
        %v1210 = vsel %vm738, %v1169, 0
        %v1213 = vsel %vm738, %v1171, 0
        %v1216 = vsel %vm738, %v1173, 0
        %v1219 = vsel %vm738, %v1175, 0
        %v1222 = vsel %vm738, %v1177, 0
        %v1225 = vsel %vm738, %v1179, 0
        %v1228 = vsel %vm738, %v1181, 0
        %v1231 = vsel %vm738, %v1191, 0
        %v1234 = vsel %vm738, %v1193, 0
        %v1237 = vsel %vm738, %v1195, 0
        %v1240 = vsel %vm738, %v1197, 0
        %v1243 = vsel %vm738, %v1199, 0
        %v1246 = vsel %vm738, %v1201, 0
        %v1249 = vsel %vm738, %v1203, 0
        %v1252 = vsel %vm738, %v1205, 0
        %1254 = vmatprep.subr.bf16.mxu0 0
        %1255 = vmatpush1.bf16.xpose.msra.mxu0 %v1231
        %1256 = vmatprep.subr.bf16.mxu0 0
        %1257 = vmatpush1.bf16.xpose.msra.mxu0 %v1234
        %1258 = vmatprep.subr.bf16.mxu0 0
        %1259 = vmatpush1.bf16.xpose.msra.mxu0 %v1237
        %1260 = vmatprep.subr.bf16.mxu0 0
        %1261 = vmatpush1.bf16.xpose.msra.mxu0 %v1240
        %1262 = vmatprep.subr.bf16.mxu0 0
        %1263 = vmatpush1.bf16.xpose.msra.mxu0 %v1243
        %1264 = vmatprep.subr.bf16.mxu0 0
        %1265 = vmatpush1.bf16.xpose.msra.mxu0 %v1246
        %1266 = vmatprep.subr.bf16.mxu0 0
        %1267 = vmatpush1.bf16.xpose.msra.mxu0 %v1249
        %1268 = vmatprep.subr.bf16.mxu0 0
        %1269 = vmatpush1.bf16.xpose.msra.mxu0 %v1252
        %1270 = vmatprep.subr.bf16.mxu0 0
        %1271 = vmatpush1.bf16.xpose.msra.mxu0 0
        %1272 = vmatprep.subr.bf16.mxu0 0
        %1273 = vmatpush1.bf16.xpose.msra.mxu0 0
        %1274 = vmatprep.subr.bf16.mxu0 0
        %1275 = vmatpush1.bf16.xpose.msra.mxu0 0
        %1276 = vmatprep.subr.bf16.mxu0 0
        %1277 = vmatpush1.bf16.xpose.msra.mxu0 0
        %1278 = vmatprep.subr.bf16.mxu0 0
        %1279 = vmatpush1.bf16.xpose.msra.mxu0 0
        %1280 = vmatprep.subr.bf16.mxu0 0
        %1281 = vmatpush1.bf16.xpose.msra.mxu0 0
        %1282 = vmatprep.subr.bf16.mxu0 0
        %1283 = vmatpush1.bf16.xpose.msra.mxu0 0
        %1284 = vmatprep.subr.bf16.mxu0 0
        %1285 = vmatpush1.bf16.xpose.msra.mxu0 0
        %1286 = vmatprep.mubr.bf16.mxu0 0
        %1287 = vmatmul.mubr.bf16.gmra.mrb[0].mxu0 %v1207
        %v1288 = vpop.f32.mrb[0].mxu0
        %v1289 = vadd.f32 %v1142, %v1288
        %v1290 = vpop.f32.mrb[0].mxu0
        %v1291 = vpop.f32.mrb[0].mxu0
        %v1292 = vadd.f32 %v1143, %v1291
        %v1293 = vpop.f32.mrb[0].mxu0
        %1294 = vmatprep.mubr.bf16.mxu0 0
        %1295 = vmatmul.mubr.bf16.gmra.mrb[0].mxu0 %v1210
        %v1296 = vpop.f32.mrb[0].mxu0
        %v1297 = vadd.f32 %v1144, %v1296
        %v1298 = vpop.f32.mrb[0].mxu0
        %v1299 = vpop.f32.mrb[0].mxu0
        %v1300 = vadd.f32 %v1145, %v1299
        %v1301 = vpop.f32.mrb[0].mxu0
        %1302 = vmatprep.mubr.bf16.mxu0 0
        %1303 = vmatmul.mubr.bf16.gmra.mrb[0].mxu0 %v1213
        %v1304 = vpop.f32.mrb[0].mxu0
        %v1305 = vadd.f32 %v1146, %v1304
        %v1306 = vpop.f32.mrb[0].mxu0
        %v1307 = vpop.f32.mrb[0].mxu0
        %v1308 = vadd.f32 %v1147, %v1307
        %v1309 = vpop.f32.mrb[0].mxu0
        %1310 = vmatprep.mubr.bf16.mxu0 0
        %1311 = vmatmul.mubr.bf16.gmra.mrb[0].mxu0 %v1216
        %v1312 = vpop.f32.mrb[0].mxu0
        %v1313 = vadd.f32 %v1148, %v1312
        %v1314 = vpop.f32.mrb[0].mxu0
        %v1315 = vpop.f32.mrb[0].mxu0
        %v1316 = vadd.f32 %v1149, %v1315
        %v1317 = vpop.f32.mrb[0].mxu0
        %1318 = vmatprep.mubr.bf16.mxu0 0
        %1319 = vmatmul.mubr.bf16.gmra.mrb[0].mxu0 %v1219
        %v1320 = vpop.f32.mrb[0].mxu0
        %v1321 = vadd.f32 %v1150, %v1320
        %v1322 = vpop.f32.mrb[0].mxu0
        %v1323 = vpop.f32.mrb[0].mxu0
        %v1324 = vadd.f32 %v1151, %v1323
        %v1325 = vpop.f32.mrb[0].mxu0
        %1326 = vmatprep.mubr.bf16.mxu0 0
        %1327 = vmatmul.mubr.bf16.gmra.mrb[0].mxu0 %v1222
        %v1328 = vpop.f32.mrb[0].mxu0
        %v1329 = vadd.f32 %v1152, %v1328
        %v1330 = vpop.f32.mrb[0].mxu0
        %v1331 = vpop.f32.mrb[0].mxu0
        %v1332 = vadd.f32 %v1153, %v1331
        %v1333 = vpop.f32.mrb[0].mxu0
        %1334 = vmatprep.mubr.bf16.mxu0 0
        %1335 = vmatmul.mubr.bf16.gmra.mrb[0].mxu0 %v1225
        %v1336 = vpop.f32.mrb[0].mxu0
        %v1337 = vadd.f32 %v1154, %v1336
        %v1338 = vpop.f32.mrb[0].mxu0
        %v1339 = vpop.f32.mrb[0].mxu0
        %v1340 = vadd.f32 %v1155, %v1339
        %v1341 = vpop.f32.mrb[0].mxu0
        %1342 = vmatprep.mubr.bf16.mxu0 0
        %1343 = vmatmul.mubr.bf16.gmra.mrb[0].mxu0 %v1228
        %v1344 = vpop.f32.mrb[0].mxu0
        %v1345 = vadd.f32 %v1156, %v1344
        %v1346 = vpop.f32.mrb[0].mxu0
        %v1347 = vpop.f32.mrb[0].mxu0
        %v1348 = vadd.f32 %v1157, %v1347
        %v1349 = vpop.f32.mrb[0].mxu0
        %1350 = vdwg.mxu0
        %1351 = vmax.xlane.f32.xlu0 %v1289
        %v1352 = vpop.xlane.xlu0 %1351
        %1353 = vmax.xlane.f32.xlu0 %v1292
        %v1354 = vpop.xlane.xlu0 %1353
        %1355 = vmax.xlane.f32.xlu0 %v1297
        %v1356 = vpop.xlane.xlu0 %1355
        %1357 = vmax.xlane.f32.xlu0 %v1300
        %v1358 = vpop.xlane.xlu0 %1357
        %1359 = vmax.xlane.f32.xlu0 %v1305
        %v1360 = vpop.xlane.xlu0 %1359
        %1361 = vmax.xlane.f32.xlu0 %v1308
        %v1362 = vpop.xlane.xlu0 %1361
        %1363 = vmax.xlane.f32.xlu0 %v1313
        %v1364 = vpop.xlane.xlu0 %1363
        %1365 = vmax.xlane.f32.xlu0 %v1316
        %v1366 = vpop.xlane.xlu0 %1365
        %1367 = vmax.xlane.f32.xlu0 %v1321
        %v1368 = vpop.xlane.xlu0 %1367
        %1369 = vmax.xlane.f32.xlu0 %v1324
        %v1370 = vpop.xlane.xlu0 %1369
        %1371 = vmax.xlane.f32.xlu0 %v1329
        %v1372 = vpop.xlane.xlu0 %1371
        %1373 = vmax.xlane.f32.xlu0 %v1332
        %v1374 = vpop.xlane.xlu0 %1373
        %1375 = vmax.xlane.f32.xlu0 %v1337
        %v1376 = vpop.xlane.xlu0 %1375
        %1377 = vmax.xlane.f32.xlu0 %v1340
        %v1378 = vpop.xlane.xlu0 %1377
        %1379 = vmax.xlane.f32.xlu0 %v1345
        %v1380 = vpop.xlane.xlu0 %1379
        %1381 = vmax.xlane.f32.xlu0 %v1348
        %v1382 = vpop.xlane.xlu0 %1381
        %v1383 = vsub.f32 %v1289, %v1352
        %v1384 = vsub.f32 %v1292, %v1354
        %v1385 = vsub.f32 %v1297, %v1356
        %v1386 = vsub.f32 %v1300, %v1358
        %v1387 = vsub.f32 %v1305, %v1360
        %v1388 = vsub.f32 %v1308, %v1362
        %v1389 = vsub.f32 %v1313, %v1364
        %v1390 = vsub.f32 %v1316, %v1366
        %v1391 = vsub.f32 %v1321, %v1368
        %v1392 = vsub.f32 %v1324, %v1370
        %v1393 = vsub.f32 %v1329, %v1372
        %v1394 = vsub.f32 %v1332, %v1374
        %v1395 = vsub.f32 %v1337, %v1376
        %v1396 = vsub.f32 %v1340, %v1378
        %v1397 = vsub.f32 %v1345, %v1380
        %v1398 = vsub.f32 %v1348, %v1382
        %v1399 = vmul.f32 %v1383, 1.442695
        %v1400 = vpow.pop %v1399
        %v1401 = vmul.f32 %v1384, 1.442695
        %v1402 = vpow.pop %v1401
        %v1403 = vmul.f32 %v1385, 1.442695
        %v1404 = vpow.pop %v1403
        %v1405 = vmul.f32 %v1386, 1.442695
        %v1406 = vpow.pop %v1405
        %v1407 = vmul.f32 %v1387, 1.442695
        %v1408 = vpow.pop %v1407
        %v1409 = vmul.f32 %v1388, 1.442695
        %v1410 = vpow.pop %v1409
        %v1411 = vmul.f32 %v1389, 1.442695
        %v1412 = vpow.pop %v1411
        %v1413 = vmul.f32 %v1390, 1.442695
        %v1414 = vpow.pop %v1413
        %v1415 = vmul.f32 %v1391, 1.442695
        %v1416 = vpow.pop %v1415
        %v1417 = vmul.f32 %v1392, 1.442695
        %v1418 = vpow.pop %v1417
        %v1419 = vmul.f32 %v1393, 1.442695
        %v1420 = vpow.pop %v1419
        %v1421 = vmul.f32 %v1394, 1.442695
        %v1422 = vpow.pop %v1421
        %v1423 = vmul.f32 %v1395, 1.442695
        %v1424 = vpow.pop %v1423
        %v1425 = vmul.f32 %v1396, 1.442695
        %v1426 = vpow.pop %v1425
        %v1427 = vmul.f32 %v1397, 1.442695
        %v1428 = vpow.pop %v1427
        %v1429 = vmul.f32 %v1398, 1.442695
        %v1430 = vpow.pop %v1429
        %1431 = vadd.xlane.f32.xlu0 %v1400
        %v1432 = vpop.xlane.xlu0 %1431
        %1433 = vadd.xlane.f32.xlu0 %v1402
        %v1434 = vpop.xlane.xlu0 %1433
        %1435 = vadd.xlane.f32.xlu0 %v1404
        %v1436 = vpop.xlane.xlu0 %1435
        %1437 = vadd.xlane.f32.xlu0 %v1406
        %v1438 = vpop.xlane.xlu0 %1437
        %1439 = vadd.xlane.f32.xlu0 %v1408
        %v1440 = vpop.xlane.xlu0 %1439
        %1441 = vadd.xlane.f32.xlu0 %v1410
        %v1442 = vpop.xlane.xlu0 %1441
        %1443 = vadd.xlane.f32.xlu0 %v1412
        %v1444 = vpop.xlane.xlu0 %1443
        %1445 = vadd.xlane.f32.xlu0 %v1414
        %v1446 = vpop.xlane.xlu0 %1445
        %1447 = vadd.xlane.f32.xlu0 %v1416
        %v1448 = vpop.xlane.xlu0 %1447
        %1449 = vadd.xlane.f32.xlu0 %v1418
        %v1450 = vpop.xlane.xlu0 %1449
        %1451 = vadd.xlane.f32.xlu0 %v1420
        %v1452 = vpop.xlane.xlu0 %1451
        %1453 = vadd.xlane.f32.xlu0 %v1422
        %v1454 = vpop.xlane.xlu0 %1453
        %1455 = vadd.xlane.f32.xlu0 %v1424
        %v1456 = vpop.xlane.xlu0 %1455
        %1457 = vadd.xlane.f32.xlu0 %v1426
        %v1458 = vpop.xlane.xlu0 %1457
        %1459 = vadd.xlane.f32.xlu0 %v1428
        %v1460 = vpop.xlane.xlu0 %1459
        %1461 = vadd.xlane.f32.xlu0 %v1430
        %v1462 = vpop.xlane.xlu0 %1461
        %v1463 = vrcp.pop %v1432
        %v1464 = vrcp.pop %v1434
        %v1465 = vrcp.pop %v1436
        %v1466 = vrcp.pop %v1438
        %v1467 = vrcp.pop %v1440
        %v1468 = vrcp.pop %v1442
        %v1469 = vrcp.pop %v1444
        %v1470 = vrcp.pop %v1446
        %v1471 = vrcp.pop %v1448
        %v1472 = vrcp.pop %v1450
        %v1473 = vrcp.pop %v1452
        %v1474 = vrcp.pop %v1454
        %v1475 = vrcp.pop %v1456
        %v1476 = vrcp.pop %v1458
        %v1477 = vrcp.pop %v1460
        %v1478 = vrcp.pop %v1462
        %v1479 = vmul.f32 %v1400, %v1463
        %v1480 = vmul.f32 %v1402, %v1464
        %v1481 = vmul.f32 %v1404, %v1465
        %v1482 = vmul.f32 %v1406, %v1466
        %v1483 = vmul.f32 %v1408, %v1467
        %v1484 = vmul.f32 %v1410, %v1468
        %v1485 = vmul.f32 %v1412, %v1469
        %v1486 = vmul.f32 %v1414, %v1470
        %v1487 = vmul.f32 %v1416, %v1471
        %v1488 = vmul.f32 %v1418, %v1472
        %v1489 = vmul.f32 %v1420, %v1473
        %v1490 = vmul.f32 %v1422, %v1474
        %v1491 = vmul.f32 %v1424, %v1475
        %v1492 = vmul.f32 %v1426, %v1476
        %v1493 = vmul.f32 %v1428, %v1477
        %v1494 = vmul.f32 %v1430, %v1478
        %v1495 = vpack.c.bf16 %v1480, %v1479
        %v1496 = vpack.c.bf16 %v1482, %v1481
        %v1497 = vpack.c.bf16 %v1484, %v1483
        %v1498 = vpack.c.bf16 %v1486, %v1485
        %v1499 = vpack.c.bf16 %v1488, %v1487
        %v1500 = vpack.c.bf16 %v1490, %v1489
        %v1501 = vpack.c.bf16 %v1492, %v1491
        %v1502 = vpack.c.bf16 %v1494, %v1493
        %1511 = vrot.lane.b32.xlu0 %v714, 64
        %v1512 = vpop.permute.xlu0 %1511
        %1513 = vrot.lane.b32.xlu0 %v715, 64
        %v1514 = vpop.permute.xlu0 %1513
        %1515 = vrot.lane.b32.xlu0 %v716, 64
        %v1516 = vpop.permute.xlu0 %1515
        %1517 = vrot.lane.b32.xlu0 %v717, 64
        %v1518 = vpop.permute.xlu0 %1517
        %1519 = vrot.lane.b32.xlu0 %v718, 64
        %v1520 = vpop.permute.xlu0 %1519
        %1521 = vrot.lane.b32.xlu0 %v719, 64
        %v1522 = vpop.permute.xlu0 %1521
        %1523 = vrot.lane.b32.xlu0 %v720, 64
        %v1524 = vpop.permute.xlu0 %1523
        %1525 = vrot.lane.b32.xlu0 %v721, 64
        %v1526 = vpop.permute.xlu0 %1525
        %1535 = vmatprep.subr.bf16.mxu0 0
        %1536 = vmatpush1.bf16.msra.mxu0 %v1512
        %1537 = vmatprep.subr.bf16.mxu0 0
        %1538 = vmatpush1.bf16.msra.mxu0 %v1514
        %1539 = vmatprep.subr.bf16.mxu0 0
        %1540 = vmatpush1.bf16.msra.mxu0 %v1516
        %1541 = vmatprep.subr.bf16.mxu0 0
        %1542 = vmatpush1.bf16.msra.mxu0 %v1518
        %1543 = vmatprep.subr.bf16.mxu0 0
        %1544 = vmatpush1.bf16.msra.mxu0 %v1520
        %1545 = vmatprep.subr.bf16.mxu0 0
        %1546 = vmatpush1.bf16.msra.mxu0 %v1522
        %1547 = vmatprep.subr.bf16.mxu0 0
        %1548 = vmatpush1.bf16.msra.mxu0 %v1524
        %1549 = vmatprep.subr.bf16.mxu0 0
        %1550 = vmatpush1.bf16.msra.mxu0 %v1526
        %1551 = vmatprep.subr.bf16.mxu0 0
        %1552 = vmatpush1.bf16.msra.mxu0 0
        %1553 = vmatprep.subr.bf16.mxu0 0
        %1554 = vmatpush1.bf16.msra.mxu0 0
        %1555 = vmatprep.subr.bf16.mxu0 0
        %1556 = vmatpush1.bf16.msra.mxu0 0
        %1557 = vmatprep.subr.bf16.mxu0 0
        %1558 = vmatpush1.bf16.msra.mxu0 0
        %1559 = vmatprep.subr.bf16.mxu0 0
        %1560 = vmatpush1.bf16.msra.mxu0 0
        %1561 = vmatprep.subr.bf16.mxu0 0
        %1562 = vmatpush1.bf16.msra.mxu0 0
        %1563 = vmatprep.subr.bf16.mxu0 0
        %1564 = vmatpush1.bf16.msra.mxu0 0
        %1565 = vmatprep.subr.bf16.mxu0 0
        %1566 = vmatpush1.bf16.msra.mxu0 0
        %1567 = vmatprep.mubr.bf16.mxu0 0
        %1568 = vmatmul.mubr.bf16.gmra.mrb[0].mxu0 %v1495
        %v1569 = vpop.f32.mrb[0].mxu0
        %v1570 = vadd.f32 0.0, %v1569
        %v1571 = vpop.f32.mrb[0].mxu0
        %v1572 = vpop.f32.mrb[0].mxu0
        %v1573 = vadd.f32 0.0, %v1572
        %v1574 = vpop.f32.mrb[0].mxu0
        %1575 = vmatprep.mubr.bf16.mxu0 0
        %1576 = vmatmul.mubr.bf16.gmra.mrb[0].mxu0 %v1496
        %v1577 = vpop.f32.mrb[0].mxu0
        %v1578 = vadd.f32 0.0, %v1577
        %v1579 = vpop.f32.mrb[0].mxu0
        %v1580 = vpop.f32.mrb[0].mxu0
        %v1581 = vadd.f32 0.0, %v1580
        %v1582 = vpop.f32.mrb[0].mxu0
        %1583 = vmatprep.mubr.bf16.mxu0 0
        %1584 = vmatmul.mubr.bf16.gmra.mrb[0].mxu0 %v1497
        %v1585 = vpop.f32.mrb[0].mxu0
        %v1586 = vadd.f32 0.0, %v1585
        %v1587 = vpop.f32.mrb[0].mxu0
        %v1588 = vpop.f32.mrb[0].mxu0
        %v1589 = vadd.f32 0.0, %v1588
        %v1590 = vpop.f32.mrb[0].mxu0
        %1591 = vmatprep.mubr.bf16.mxu0 0
        %1592 = vmatmul.mubr.bf16.gmra.mrb[0].mxu0 %v1498
        %v1593 = vpop.f32.mrb[0].mxu0
        %v1594 = vadd.f32 0.0, %v1593
        %v1595 = vpop.f32.mrb[0].mxu0
        %v1596 = vpop.f32.mrb[0].mxu0
        %v1597 = vadd.f32 0.0, %v1596
        %v1598 = vpop.f32.mrb[0].mxu0
        %1599 = vmatprep.mubr.bf16.mxu0 0
        %1600 = vmatmul.mubr.bf16.gmra.mrb[0].mxu0 %v1499
        %v1601 = vpop.f32.mrb[0].mxu0
        %v1602 = vadd.f32 0.0, %v1601
        %v1603 = vpop.f32.mrb[0].mxu0
        %v1604 = vpop.f32.mrb[0].mxu0
        %v1605 = vadd.f32 0.0, %v1604
        %v1606 = vpop.f32.mrb[0].mxu0
        %1607 = vmatprep.mubr.bf16.mxu0 0
        %1608 = vmatmul.mubr.bf16.gmra.mrb[0].mxu0 %v1500
        %v1609 = vpop.f32.mrb[0].mxu0
        %v1610 = vadd.f32 0.0, %v1609
        %v1611 = vpop.f32.mrb[0].mxu0
        %v1612 = vpop.f32.mrb[0].mxu0
        %v1613 = vadd.f32 0.0, %v1612
        %v1614 = vpop.f32.mrb[0].mxu0
        %1615 = vmatprep.mubr.bf16.mxu0 0
        %1616 = vmatmul.mubr.bf16.gmra.mrb[0].mxu0 %v1501
        %v1617 = vpop.f32.mrb[0].mxu0
        %v1618 = vadd.f32 0.0, %v1617
        %v1619 = vpop.f32.mrb[0].mxu0
        %v1620 = vpop.f32.mrb[0].mxu0
        %v1621 = vadd.f32 0.0, %v1620
        %v1622 = vpop.f32.mrb[0].mxu0
        %1623 = vmatprep.mubr.bf16.mxu0 0
        %1624 = vmatmul.mubr.bf16.gmra.mrb[0].mxu0 %v1502
        %v1625 = vpop.f32.mrb[0].mxu0
        %v1626 = vadd.f32 0.0, %v1625
        %v1627 = vpop.f32.mrb[0].mxu0
        %v1628 = vpop.f32.mrb[0].mxu0
        %v1629 = vadd.f32 0.0, %v1628
        %v1630 = vpop.f32.mrb[0].mxu0
        %1631 = vdwg.mxu0
        %v1632 = vpack.c.bf16 %v1573, %v1570
        %v1633 = vpack.c.bf16 %v1581, %v1578
        %v1634 = vpack.c.bf16 %v1589, %v1586
        %v1635 = vpack.c.bf16 %v1597, %v1594
        %v1636 = vpack.c.bf16 %v1605, %v1602
        %v1637 = vpack.c.bf16 %v1613, %v1610
        %v1638 = vpack.c.bf16 %v1621, %v1618
        %v1639 = vpack.c.bf16 %v1629, %v1626
        %1648 = vrot.lane.b32.xlu0 %v1632, 64
        %v1649 = vpop.permute.xlu0 %1648
        %1650 = vrot.lane.b32.xlu0 %v1633, 64
        %v1651 = vpop.permute.xlu0 %1650
        %1652 = vrot.lane.b32.xlu0 %v1634, 64
        %v1653 = vpop.permute.xlu0 %1652
        %1654 = vrot.lane.b32.xlu0 %v1635, 64
        %v1655 = vpop.permute.xlu0 %1654
        %1656 = vrot.lane.b32.xlu0 %v1636, 64
        %v1657 = vpop.permute.xlu0 %1656
        %1658 = vrot.lane.b32.xlu0 %v1637, 64
        %v1659 = vpop.permute.xlu0 %1658
        %1660 = vrot.lane.b32.xlu0 %v1638, 64
        %v1661 = vpop.permute.xlu0 %1660
        %1662 = vrot.lane.b32.xlu0 %v1639, 64
        %v1663 = vpop.permute.xlu0 %1662
        %v1666 = vsel %vm738, %v1133, %v1649
        %v1670 = vsel %vm738, %v1134, %v1651
        %v1674 = vsel %vm738, %v1135, %v1653
        %v1678 = vsel %vm738, %v1136, %v1655
        %v1682 = vsel %vm738, %v1137, %v1657
        %v1686 = vsel %vm738, %v1138, %v1659
        %v1690 = vsel %vm738, %v1139, %v1661
        %v1694 = vsel %vm738, %v1140, %v1663
        %v1696 = vld [vmem:[#allocation8] sm:$0xf]
        %v1697 = vld [vmem:[#allocation8 + $0x4] sm:$0xf]
        %v1698 = vld [vmem:[#allocation8 + $0x8] sm:$0xf]
        %v1699 = vld [vmem:[#allocation8 + $0xc] sm:$0xf]
        %v1700 = vld [vmem:[#allocation8 + $0x10] sm:$0xf]
        %v1701 = vld [vmem:[#allocation8 + $0x14] sm:$0xf]
        %v1702 = vld [vmem:[#allocation8 + $0x18] sm:$0xf]
        %v1703 = vld [vmem:[#allocation8 + $0x1c] sm:$0xf]
        %v1704 = vld [vmem:[#allocation8 + $0x20] sm:$0xf]
        %v1705 = vld [vmem:[#allocation8 + $0x24] sm:$0xf]
        %v1706 = vld [vmem:[#allocation8 + $0x28] sm:$0xf]
        %v1707 = vld [vmem:[#allocation8 + $0x2c] sm:$0xf]
        %v1708 = vld [vmem:[#allocation8 + $0x30] sm:$0xf]
        %v1709 = vld [vmem:[#allocation8 + $0x34] sm:$0xf]
        %v1710 = vld [vmem:[#allocation8 + $0x38] sm:$0xf]
        %v1711 = vld [vmem:[#allocation8 + $0x3c] sm:$0xf]
        %v1712 = vld [vmem:[%s4] sm:$0x1]
        %v1714 = vlaneseq
        %v1715 = vshrl.u32 %v1714, 7
        %v1716 = vsub.s32 0, %v1715
        %v1717 = vrot.slane %v1712, %v1716
        %v1735 = vunpack.c.l.b16 %v1696
        %v1736 = vunpack.c.l.b16 %v1697
        %v1737 = vunpack.c.l.b16 %v1698
        %v1738 = vunpack.c.l.b16 %v1699
        %v1739 = vunpack.c.l.b16 %v1700
        %v1740 = vunpack.c.l.b16 %v1701
        %v1741 = vunpack.c.l.b16 %v1702
        %v1742 = vunpack.c.l.b16 %v1703
        %v1743 = vunpack.c.l.b16 %v1704
        %v1744 = vunpack.c.l.b16 %v1705
        %v1745 = vunpack.c.l.b16 %v1706
        %v1746 = vunpack.c.l.b16 %v1707
        %v1747 = vunpack.c.l.b16 %v1708
        %v1748 = vunpack.c.l.b16 %v1709
        %v1749 = vunpack.c.l.b16 %v1710
        %v1750 = vunpack.c.l.b16 %v1711
        %v1751 = vpack.c.b16 %v1736, %v1735
        %v1752 = vpack.c.b16 %v1738, %v1737
        %v1753 = vpack.c.b16 %v1740, %v1739
        %v1754 = vpack.c.b16 %v1742, %v1741
        %v1755 = vpack.c.b16 %v1744, %v1743
        %v1756 = vpack.c.b16 %v1746, %v1745
        %v1757 = vpack.c.b16 %v1748, %v1747
        %v1758 = vpack.c.b16 %v1750, %v1749
        %1767 = vmatprep.subr.bf16.mxu0 0
        %1768 = vmatpush1.bf16.msra.mxu0 %v1751
        %1769 = vmatprep.subr.bf16.mxu0 0
        %1770 = vmatpush1.bf16.msra.mxu0 %v1752
        %1771 = vmatprep.subr.bf16.mxu0 0
        %1772 = vmatpush1.bf16.msra.mxu0 %v1753
        %1773 = vmatprep.subr.bf16.mxu0 0
        %1774 = vmatpush1.bf16.msra.mxu0 %v1754
        %1775 = vmatprep.subr.bf16.mxu0 0
        %1776 = vmatpush1.bf16.msra.mxu0 %v1755
        %1777 = vmatprep.subr.bf16.mxu0 0
        %1778 = vmatpush1.bf16.msra.mxu0 %v1756
        %1779 = vmatprep.subr.bf16.mxu0 0
        %1780 = vmatpush1.bf16.msra.mxu0 %v1757
        %1781 = vmatprep.subr.bf16.mxu0 0
        %1782 = vmatpush1.bf16.msra.mxu0 %v1758
        %1783 = vmatprep.subr.bf16.mxu0 0
        %1784 = vmatpush1.bf16.msra.mxu0 0
        %1785 = vmatprep.subr.bf16.mxu0 0
        %1786 = vmatpush1.bf16.msra.mxu0 0
        %1787 = vmatprep.subr.bf16.mxu0 0
        %1788 = vmatpush1.bf16.msra.mxu0 0
        %1789 = vmatprep.subr.bf16.mxu0 0
        %1790 = vmatpush1.bf16.msra.mxu0 0
        %1791 = vmatprep.subr.bf16.mxu0 0
        %1792 = vmatpush1.bf16.msra.mxu0 0
        %1793 = vmatprep.subr.bf16.mxu0 0
        %1794 = vmatpush1.bf16.msra.mxu0 0
        %1795 = vmatprep.subr.bf16.mxu0 0
        %1796 = vmatpush1.bf16.msra.mxu0 0
        %1797 = vmatprep.subr.bf16.mxu0 0
        %1798 = vmatpush1.bf16.msra.mxu0 0
        %1799 = vmatprep.mubr.bf16.mxu0 0
        %1800 = vmatmul.mubr.bf16.gmra.mrb[0].mxu0 %v1666
        %v1801 = vpop.f32.mrb[0].mxu0
        %v1802 = vadd.f32 %v1717, %v1801
        %v1803 = vpop.f32.mrb[0].mxu0
        %v1804 = vpop.f32.mrb[0].mxu0
        %v1805 = vadd.f32 %v1717, %v1804
        %v1806 = vpop.f32.mrb[0].mxu0
        %1807 = vmatprep.mubr.bf16.mxu0 0
        %1808 = vmatmul.mubr.bf16.gmra.mrb[0].mxu0 %v1670
        %v1809 = vpop.f32.mrb[0].mxu0
        %v1810 = vadd.f32 %v1717, %v1809
        %v1811 = vpop.f32.mrb[0].mxu0
        %v1812 = vpop.f32.mrb[0].mxu0
        %v1813 = vadd.f32 %v1717, %v1812
        %v1814 = vpop.f32.mrb[0].mxu0
        %1815 = vmatprep.mubr.bf16.mxu0 0
        %1816 = vmatmul.mubr.bf16.gmra.mrb[0].mxu0 %v1674
        %v1817 = vpop.f32.mrb[0].mxu0
        %v1818 = vadd.f32 %v1717, %v1817
        %v1819 = vpop.f32.mrb[0].mxu0
        %v1820 = vpop.f32.mrb[0].mxu0
        %v1821 = vadd.f32 %v1717, %v1820
        %v1822 = vpop.f32.mrb[0].mxu0
        %1823 = vmatprep.mubr.bf16.mxu0 0
        %1824 = vmatmul.mubr.bf16.gmra.mrb[0].mxu0 %v1678
        %v1825 = vpop.f32.mrb[0].mxu0
        %v1826 = vadd.f32 %v1717, %v1825
        %v1827 = vpop.f32.mrb[0].mxu0
        %v1828 = vpop.f32.mrb[0].mxu0
        %v1829 = vadd.f32 %v1717, %v1828
        %v1830 = vpop.f32.mrb[0].mxu0
        %1831 = vmatprep.mubr.bf16.mxu0 0
        %1832 = vmatmul.mubr.bf16.gmra.mrb[0].mxu0 %v1682
        %v1833 = vpop.f32.mrb[0].mxu0
        %v1834 = vadd.f32 %v1717, %v1833
        %v1835 = vpop.f32.mrb[0].mxu0
        %v1836 = vpop.f32.mrb[0].mxu0
        %v1837 = vadd.f32 %v1717, %v1836
        %v1838 = vpop.f32.mrb[0].mxu0
        %1839 = vmatprep.mubr.bf16.mxu0 0
        %1840 = vmatmul.mubr.bf16.gmra.mrb[0].mxu0 %v1686
        %v1841 = vpop.f32.mrb[0].mxu0
        %v1842 = vadd.f32 %v1717, %v1841
        %v1843 = vpop.f32.mrb[0].mxu0
        %v1844 = vpop.f32.mrb[0].mxu0
        %v1845 = vadd.f32 %v1717, %v1844
        %v1846 = vpop.f32.mrb[0].mxu0
        %1847 = vmatprep.mubr.bf16.mxu0 0
        %1848 = vmatmul.mubr.bf16.gmra.mrb[0].mxu0 %v1690
        %v1849 = vpop.f32.mrb[0].mxu0
        %v1850 = vadd.f32 %v1717, %v1849
        %v1851 = vpop.f32.mrb[0].mxu0
        %v1852 = vpop.f32.mrb[0].mxu0
        %v1853 = vadd.f32 %v1717, %v1852
        %v1854 = vpop.f32.mrb[0].mxu0
        %1855 = vmatprep.mubr.bf16.mxu0 0
        %1856 = vmatmul.mubr.bf16.gmra.mrb[0].mxu0 %v1694
        %v1857 = vpop.f32.mrb[0].mxu0
        %v1858 = vadd.f32 %v1717, %v1857
        %v1859 = vpop.f32.mrb[0].mxu0
        %v1860 = vpop.f32.mrb[0].mxu0
        %v1861 = vadd.f32 %v1717, %v1860
        %v1862 = vpop.f32.mrb[0].mxu0
        %1863 = vdwg.mxu0
        %1864 = vst [vmem:[%s286] sm:$0xff] %v1802
        %1865 = vst [vmem:[%s286 + $0x8] sm:$0xff] %v1805
        %1866 = vst [vmem:[%s286 + $0x10] sm:$0xff] %v1810
        %1867 = vst [vmem:[%s286 + $0x18] sm:$0xff] %v1813
        %1868 = vst [vmem:[%s286 + $0x20] sm:$0xff] %v1818
        %1869 = vst [vmem:[%s286 + $0x28] sm:$0xff] %v1821
        %1870 = vst [vmem:[%s286 + $0x30] sm:$0xff] %v1826
        %1871 = vst [vmem:[%s286 + $0x38] sm:$0xff] %v1829
        %1872 = vst [vmem:[%s286 + $0x40] sm:$0xff] %v1834
        %1873 = vst [vmem:[%s286 + $0x48] sm:$0xff] %v1837
        %1874 = vst [vmem:[%s286 + $0x50] sm:$0xff] %v1842
        %1875 = vst [vmem:[%s286 + $0x58] sm:$0xff] %v1845
        %1876 = vst [vmem:[%s286 + $0x60] sm:$0xff] %v1850
        %1877 = vst [vmem:[%s286 + $0x68] sm:$0xff] %v1853
        %1878 = vst [vmem:[%s286 + $0x70] sm:$0xff] %v1858
        %1879 = vst [vmem:[%s286 + $0x78] sm:$0xff] %v1861
        %s1880 = sand.u32 %s142, 1
        %s1881 = scalar_lea.sflag [#allocation4], %s1880
        %s1882 = sand.u32 %s142, 1
        %s1883 = smul.addr %s1882, 128
        %s1884 = scalar_lea.vmem [#allocation10], %s1883
        // Predicated region
        $region57: #{tpu_custom_call.1} parent=39 // pred_check
          %p1885 = pneg %p152
        $region58: #{tpu_custom_call.1} parent=39 // pred_check_branch
          %1887 = sbr.rel (%p1885) target = $region60
        $region59: #{tpu_custom_call.1} parent=39 // pred_region
          %s1889 = ssub.s32 2048, 2048
          %1890 = vsyncadd %s1881, %s1889
          %s1891 = smul.addr %s24, 16
          %s1892 = smul.addr %s1891, 128
          %s1893 = scalar_lea.hbm %s5, %s1892
          %s1894 = sshll.u32 %s1884, 4
          %s1895 = int_to_ptr.vmem [resolvable:$true] %s1894
          %1900 = dma.vmem_to_hbm [thread:$0]  %s1895, 2048, %s1893, %s1881, 128, 128, 8
        $region60: #{tpu_custom_call.1} parent=39 // pred_fallthru
          _
      $region40: #{tpu_custom_call.1} parent=5 // pred_fallthru
        _
      %p1901 = scmp.le.s32.totalorder 2, %s19
      // Predicated region
      $region61: #{tpu_custom_call.1} parent=5 // pred_check
        %p1902 = pneg %p1901
      $region62: #{tpu_custom_call.1} parent=5 // pred_check_branch
        %1904 = sbr.rel (%p1902) target = $region64
      $region63: #{tpu_custom_call.1} parent=5 // pred_region
        %s1905 = ssub.s32 %s19, 2
        // Predicated region
        $region65: #{tpu_custom_call.1} parent=63 // pred_check
          %p1906 = pneg %p158
        $region66: #{tpu_custom_call.1} parent=63 // pred_check_branch
          %1908 = sbr.rel (%p1906) target = $region68
        $region67: #{tpu_custom_call.1} parent=63 // pred_region
          %s1909 = sand.u32 %s143, 1
          %s1910 = scalar_lea.sflag [#allocation4], %s1909
          %s1911 = sand.u32 %s143, 1
          %s1912 = smul.addr %s1911, 128
          %s1913 = scalar_lea.vmem [#allocation10], %s1912
          %1914 = dma.done %s1910, 2048
        $region68: #{tpu_custom_call.1} parent=63 // pred_fallthru
          _
      $region64: #{tpu_custom_call.1} parent=5 // pred_fallthru
        _
    $region6: #{tpu_custom_call.1} parent=1 // loop_footer
      %s23 = sadd.s32 1, %s19
    $region7: #{tpu_custom_call.1} parent=1 // loop_footer_branch
      %18 = sbr.rel target = $region3
    $region8: #{tpu_custom_call.1} parent=1 // loop_exit
      _
    %1915 = vsyncpa [#allocation3], 1
    %s1916 = scalar_lea.sflag [#allocation3], 1
    %1917 = vsyncpa %s1916, 1
    %1918 = vsyncpa [#allocation6], 1
    %1919 = vsyncpa [#allocation9], 1
    %1920 = vsyncpa [#allocation4], 1
    %s1921 = scalar_lea.sflag [#allocation4], 1
    %1922 = vsyncpa %s1921, 1

</llo_original>
